<compile_context>
chip_gen: v5e
topology: v5e:2x2
jax: 0.10.0
libtpu: 0.0.40
codegen_flags: <defaults>
</compile_context>

<pallas_src>
import jax
import jax.numpy as jnp
from jax.experimental import pallas as pl
from jax.experimental.pallas import tpu as pltpu


def pdanet_kernel(
    x_ref,                       # (Bt, S, C)  bf16 feature block (Bt batch images)
    w1_ref, b1_ref,              # SE conv1   (C, C) bf16, (1, C) f32
    w2_ref, b2_ref,              # SE conv2   (C, C) bf16, (1, C) f32
    wfc_ref, bfc_ref,            # spatial fc (C, C) bf16, (1, C) f32
    wsp_ref, bsp_ref,            # spatial conv  (C, C) bf16, (1, C) f32
    wsp2_ref, bsp2_ref,          # spatial conv2 (1, C) f32, (1, 1) f32
    wca_ref, wcb_ref, bcls_ref,  # classifier split: (C, NC), (C, NC), (1, NC) f32
    out_ref,                     # (1, Bt, NC) f32
):
    Bt, S, C = x_ref.shape
    x2 = x_ref[...].reshape(Bt * S, C)                     # bf16 (Bt*S, C)

    # ---------------- SENet_block ----------------
    out1 = jax.nn.sigmoid(
        jnp.dot(x2, w1_ref[...], preferred_element_type=jnp.float32) + b1_ref[...]
    )                                                      # (Bt*S, C) f32
    cw = jnp.mean(out1.reshape(Bt, S, C), axis=1)          # (Bt, C)  out_channel_wise

    out2 = jnp.maximum(
        jnp.dot(x2, w2_ref[...], preferred_element_type=jnp.float32) + b2_ref[...],
        0.0,
    )                                                      # (Bt*S, C) f32
    out2_3 = out2.reshape(Bt, S, C)

    # mean_S(out2 * cw) == mean_S(out2) * cw   (cw is constant along S)
    se_feat = jnp.mean(out2_3, axis=1) * cw                # (Bt, C)

    # -------- spatial_block (input = out2, channel_wise = cw) --------
    cw_fc = (
        jnp.dot(cw.astype(jnp.bfloat16), wfc_ref[...],
                preferred_element_type=jnp.float32)
        + bfc_ref[...]
    )                                                      # (Bt, C)
    sp = (
        jnp.dot(out2.astype(jnp.bfloat16), wsp_ref[...],
                preferred_element_type=jnp.float32)
        + bsp_ref[...]
    ).reshape(Bt, S, C)
    sp = jnp.tanh(sp + cw_fc[:, None, :])                  # (Bt, S, C)

    # 1-channel 1x1 conv as a lane reduction (avoids a width-1 MXU matmul).
    att = jnp.sum(sp * wsp2_ref[...], axis=-1, keepdims=True) + bsp2_ref[...]
    # softmax over the spatial axis
    att = att - jnp.max(att, axis=1, keepdims=True)
    att = jnp.exp(att)
    att = att * pl.reciprocal(jnp.sum(att, axis=1, keepdims=True), approx=True)

    sp_feat = jnp.mean(out2_3 * att, axis=1)               # (Bt, C)

    # ------------- classifier on cat(se_feat, sp_feat) -------------
    logits = (
        jnp.dot(se_feat, wca_ref[...], preferred_element_type=jnp.float32)
        + jnp.dot(sp_feat, wcb_ref[...], preferred_element_type=jnp.float32)
        + bcls_ref[...]
    )                                                      # (Bt, NC)
    out_ref[0] = logits


def prepare_params(params):
    """One-time weight prep: transpose, bf16 cast, classifier split, 2D biases."""
    C = params["w1"].shape[0]
    NC = params["bcls"].shape[0]
    wcls = params["wcls"]
    f32 = jnp.float32
    return {
        "w1": params["w1"].T.astype(jnp.bfloat16),
        "b1": params["b1"].reshape(1, C).astype(f32),
        "w2": params["w2"].T.astype(jnp.bfloat16),
        "b2": params["b2"].reshape(1, C).astype(f32),
        "wfc": params["wfc"].T.astype(jnp.bfloat16),
        "bfc": params["bfc"].reshape(1, C).astype(f32),
        "wsp": params["wsp"].T.astype(jnp.bfloat16),
        "bsp": params["bsp"].reshape(1, C).astype(f32),
        "wsp2": params["wsp2"].reshape(1, C).astype(f32),   # row vector, lane reduce
        "bsp2": params["bsp2"].reshape(1, 1).astype(f32),
        "wca": wcls[:, :C].T.astype(f32),                   # multiplies se_feat
        "wcb": wcls[:, C:].T.astype(f32),                   # multiplies spatial_feat
        "bcls": params["bcls"].reshape(1, NC).astype(f32),
    }


def _single_buffered():
    if not hasattr(pl, "Buffered"):
        return None
    try:
        return pl.Buffered(1)
    except Exception:
        return None


_SINGLE_BUF = _single_buffered()


def _const_spec(shape):
    """BlockSpec for a grid-invariant (weight) operand: single-buffered if supported."""
    index_map = lambda *_: (0,) * len(shape)
    if _SINGLE_BUF is not None:
        try:
            return pl.BlockSpec(shape, index_map, pipeline_mode=_SINGLE_BUF)
        except TypeError:  # older jax without pipeline_mode kwarg
            pass
    return pl.BlockSpec(shape, index_map)


def pdanet_forward(x_nchw, p, *, block_b=None):
    """x_nchw: (B, C, H, W) backbone feature map -> (B, num_classes) logits."""
    B, C, H, W = x_nchw.shape
    S = H * W
    NC = p["bcls"].shape[-1]

    # Batch elements per grid step: target ~256 MXU rows (Bt*S) per matmul.
    if block_b is None:
        block_b = max(1, min(B, max(1, 256 // S)))
    nb = -(-B // block_b)            # ceil
    B_pad = nb * block_b

    # NCHW -> (B, S, C) channels-last flattened spatial; bf16 matmul operand.
    x = jnp.transpose(x_nchw, (0, 2, 3, 1)).reshape(B, S, C).astype(jnp.bfloat16)
    if B_pad != B:
        x = jnp.pad(x, ((0, B_pad - B), (0, 0), (0, 0)))

    out = pl.pallas_call(
        pdanet_kernel,
        out_shape=jax.ShapeDtypeStruct((nb, block_b, NC), jnp.float32),
        grid_spec=pltpu.PrefetchScalarGridSpec(
            num_scalar_prefetch=0,
            grid=(nb,),
            in_specs=[
                pl.BlockSpec((block_b, S, C), lambda b: (b, 0, 0)),  # x (Bt batch)
                _const_spec((C, C)), _const_spec((1, C)),            # w1, b1
                _const_spec((C, C)), _const_spec((1, C)),            # w2, b2
                _const_spec((C, C)), _const_spec((1, C)),            # wfc, bfc
                _const_spec((C, C)), _const_spec((1, C)),            # wsp, bsp
                _const_spec((1, C)), _const_spec((1, 1)),            # wsp2, bsp2
                _const_spec((C, NC)), _const_spec((C, NC)), _const_spec((1, NC)),
            ],
            out_specs=pl.BlockSpec((1, block_b, NC), lambda b: (b, 0, 0)),
        ),
        compiler_params=pltpu.CompilerParams(
            # bf16 + single-buffered weights keep residency ~32-40 MiB at
            # C=2048, which fits the per-TC budget even on v7x, so megacore
            # sharding of the batch axis stays enabled.
            dimension_semantics=("parallel",),
            vmem_limit_bytes=64 * 1024 * 1024,
        ),
    )(
        x,
        p["w1"], p["b1"], p["w2"], p["b2"],
        p["wfc"], p["bfc"], p["wsp"], p["bsp"],
        p["wsp2"], p["bsp2"],
        p["wca"], p["wcb"], p["bcls"],
    )

    return out.reshape(B_pad, NC)[:B]


def pdanet_reference(x_nchw, params):
    """Pure-JAX f32 reference mirroring the PyTorch forward exactly."""
    B, C, H, W = x_nchw.shape
    x = jnp.transpose(x_nchw, (0, 2, 3, 1)).reshape(B, H * W, C)

    # SENet_block
    out1 = jax.nn.sigmoid(x @ params["w1"].T + params["b1"])
    cw = out1.mean(axis=1)                                   # (B, C)
    out2 = jax.nn.relu(x @ params["w2"].T + params["b2"])
    se = out2 * cw[:, None, :]
    se_feat = se.mean(axis=1)                                # (B, C)

    # spatial_block
    cw_fc = cw @ params["wfc"].T + params["bfc"]
    sp = jnp.tanh(out2 @ params["wsp"].T + params["bsp"] + cw_fc[:, None, :])
    att = sp @ params["wsp2"].T + params["bsp2"]             # (B, S, 1)
    att = jax.nn.softmax(att[..., 0], axis=1)[..., None]
    sp_feat = (out2 * att).mean(axis=1)                      # (B, C)

    feat = jnp.concatenate([se_feat, sp_feat], axis=1)       # (B, 2C)
    return feat @ params["wcls"].T + params["bcls"]


def make_params(key, C, NC):
    ks = jax.random.split(key, 12)
    nrm = lambda k, shape, s=0.05: (s * jax.random.normal(k, shape)).astype(jnp.float32)
    return {
        "w1": nrm(ks[0], (C, C)), "b1": nrm(ks[1], (C,)),
        "w2": nrm(ks[2], (C, C)), "b2": nrm(ks[3], (C,)),
        "wfc": nrm(ks[4], (C, C)), "bfc": nrm(ks[5], (C,)),
        "wsp": nrm(ks[6], (C, C)), "bsp": nrm(ks[7], (C,)),
        "wsp2": nrm(ks[8], (1, C)), "bsp2": nrm(ks[9], (1,)),
        "wcls": nrm(ks[10], (NC, 2 * C)), "bcls": nrm(ks[11], (NC,)),
    }


if __name__ == "__main__":
    # Small synthetic shapes (original uses C=2048, 7x7 backbone features).
    B, C, H, W, NC = 2, 128, 8, 8, 8

    key = jax.random.PRNGKey(0)
    k_x, k_p = jax.random.split(key)
    x = jax.random.normal(k_x, (B, C, H, W), jnp.float32)  # backbone feature map
    params = make_params(k_p, C, NC)

    prepped = prepare_params(params)          # one-time weight prep (outside jit)
    fwd = jax.jit(pdanet_forward)
    out = jax.block_until_ready(fwd(x, prepped))
    ref = jax.block_until_ready(pdanet_reference(x, params))

    assert out.shape == (B, NC), out.shape
    # bf16 matmul operands (f32 accumulation) + approx reciprocal -> relaxed
    # tolerance vs the pure-f32 reference.
    assert jnp.allclose(out, ref, atol=2e-2, rtol=2e-2), (
        f"max abs err = {jnp.max(jnp.abs(out - ref))}"
    )
    print("KERNEL_OK")
</pallas_src>

<mosaic_0001>
module attributes {stable_mosaic.version = 11 : i64} {
  func.func @pdanet_kernel(%arg0: i32, %arg1: memref<2x64x128xbf16, #tpu.memory_space<vmem>>, %arg2: memref<128x128xbf16, #tpu.memory_space<vmem>>, %arg3: memref<1x128xf32, #tpu.memory_space<vmem>>, %arg4: memref<128x128xbf16, #tpu.memory_space<vmem>>, %arg5: memref<1x128xf32, #tpu.memory_space<vmem>>, %arg6: memref<128x128xbf16, #tpu.memory_space<vmem>>, %arg7: memref<1x128xf32, #tpu.memory_space<vmem>>, %arg8: memref<128x128xbf16, #tpu.memory_space<vmem>>, %arg9: memref<1x128xf32, #tpu.memory_space<vmem>>, %arg10: memref<1x128xf32, #tpu.memory_space<vmem>>, %arg11: memref<1x1xf32, #tpu.memory_space<vmem>>, %arg12: memref<128x8xf32, #tpu.memory_space<vmem>>, %arg13: memref<128x8xf32, #tpu.memory_space<vmem>>, %arg14: memref<1x8xf32, #tpu.memory_space<vmem>>, %arg15: memref<1x2x8xf32, #tpu.memory_space<vmem>>) attributes {dimension_semantics = [#tpu.dimension_semantics<parallel>], iteration_bounds = array<i64: 1>, scalar_prefetch = 0 : i64, scratch_operands = 0 : i64, tpu.core_type = #tpu.core_type<tc>, window_params = [{transform_indices = @transform_0, window_bounds = array<i64: 2, 64, 128>}, {pipeline_mode = #tpu.pipeline_mode<synchronous>, transform_indices = @transform_1, window_bounds = array<i64: 128, 128>}, {pipeline_mode = #tpu.pipeline_mode<synchronous>, transform_indices = @transform_2, window_bounds = array<i64: 1, 128>}, {pipeline_mode = #tpu.pipeline_mode<synchronous>, transform_indices = @transform_3, window_bounds = array<i64: 128, 128>}, {pipeline_mode = #tpu.pipeline_mode<synchronous>, transform_indices = @transform_4, window_bounds = array<i64: 1, 128>}, {pipeline_mode = #tpu.pipeline_mode<synchronous>, transform_indices = @transform_5, window_bounds = array<i64: 128, 128>}, {pipeline_mode = #tpu.pipeline_mode<synchronous>, transform_indices = @transform_6, window_bounds = array<i64: 1, 128>}, {pipeline_mode = #tpu.pipeline_mode<synchronous>, transform_indices = @transform_7, window_bounds = array<i64: 128, 128>}, {pipeline_mode = #tpu.pipeline_mode<synchronous>, transform_indices = @transform_8, window_bounds = array<i64: 1, 128>}, {pipeline_mode = #tpu.pipeline_mode<synchronous>, transform_indices = @transform_9, window_bounds = array<i64: 1, 128>}, {pipeline_mode = #tpu.pipeline_mode<synchronous>, transform_indices = @transform_10, window_bounds = array<i64: 1, 1>}, {pipeline_mode = #tpu.pipeline_mode<synchronous>, transform_indices = @transform_11, window_bounds = array<i64: 128, 8>}, {pipeline_mode = #tpu.pipeline_mode<synchronous>, transform_indices = @transform_12, window_bounds = array<i64: 128, 8>}, {pipeline_mode = #tpu.pipeline_mode<synchronous>, transform_indices = @transform_13, window_bounds = array<i64: 1, 8>}, {transform_indices = @transform_14, window_bounds = array<i64: 1, 2, 8>}]} {
    %c0 = arith.constant 0 : index
    %c0_0 = arith.constant 0 : index
    %c0_1 = arith.constant 0 : index
    %0 = vector.load %arg1[%c0, %c0_0, %c0_1] : memref<2x64x128xbf16, #tpu.memory_space<vmem>>, vector<2x64x128xbf16>
    %1 = vector.shape_cast %0 : vector<2x64x128xbf16> to vector<128x128xbf16>
    %c0_2 = arith.constant 0 : index
    %c0_3 = arith.constant 0 : index
    %2 = vector.load %arg2[%c0_2, %c0_3] : memref<128x128xbf16, #tpu.memory_space<vmem>>, vector<128x128xbf16>
    %cst = arith.constant dense<0.000000e+00> : vector<128x128xf32>
    %3 = tpu.matmul %1, %2, %cst {dimension_numbers = #tpu.dot_dimension_numbers<[1], [0], [0], [1], [0, 0, 1, 1], [], []>} : vector<128x128xbf16>, vector<128x128xbf16>, vector<128x128xf32> -> vector<128x128xf32>
    %c0_4 = arith.constant 0 : index
    %c0_5 = arith.constant 0 : index
    %4 = vector.load %arg3[%c0_4, %c0_5] : memref<1x128xf32, #tpu.memory_space<vmem>>, vector<1x128xf32>
    %5 = vector.broadcast %4 : vector<1x128xf32> to vector<128x128xf32>
    %6 = arith.addf %3, %5 : vector<128x128xf32>
    %7 = arith.negf %6 : vector<128x128xf32>
    %8 = math.exp %7 : vector<128x128xf32>
    %cst_6 = arith.constant 1.000000e+00 : f32
    %9 = vector.broadcast %cst_6 : f32 to vector<128x128xf32>
    %10 = arith.addf %9, %8 : vector<128x128xf32>
    %11 = arith.divf %9, %10 : vector<128x128xf32>
    %12 = vector.shape_cast %11 : vector<128x128xf32> to vector<2x64x128xf32>
    %cst_7 = arith.constant dense<0.000000e+00> : vector<2x128xf32>
    %13 = vector.multi_reduction <add>, %12, %cst_7 [1] : vector<2x64x128xf32> to vector<2x128xf32>
    %cst_8 = arith.constant 6.400000e+01 : f32
    %14 = vector.broadcast %cst_8 : f32 to vector<2x128xf32>
    %15 = arith.divf %13, %14 : vector<2x128xf32>
    %c0_9 = arith.constant 0 : index
    %c0_10 = arith.constant 0 : index
    %16 = vector.load %arg4[%c0_9, %c0_10] : memref<128x128xbf16, #tpu.memory_space<vmem>>, vector<128x128xbf16>
    %cst_11 = arith.constant dense<0.000000e+00> : vector<128x128xf32>
    %17 = tpu.matmul %1, %16, %cst_11 {dimension_numbers = #tpu.dot_dimension_numbers<[1], [0], [0], [1], [0, 0, 1, 1], [], []>} : vector<128x128xbf16>, vector<128x128xbf16>, vector<128x128xf32> -> vector<128x128xf32>
    %c0_12 = arith.constant 0 : index
    %c0_13 = arith.constant 0 : index
    %18 = vector.load %arg5[%c0_12, %c0_13] : memref<1x128xf32, #tpu.memory_space<vmem>>, vector<1x128xf32>
    %19 = vector.broadcast %18 : vector<1x128xf32> to vector<128x128xf32>
    %20 = arith.addf %17, %19 : vector<128x128xf32>
    %cst_14 = arith.constant 0.000000e+00 : f32
    %21 = vector.broadcast %cst_14 : f32 to vector<128x128xf32>
    %22 = arith.maximumf %20, %21 : vector<128x128xf32>
    %23 = vector.shape_cast %22 : vector<128x128xf32> to vector<2x64x128xf32>
    %cst_15 = arith.constant dense<0.000000e+00> : vector<2x128xf32>
    %24 = vector.multi_reduction <add>, %23, %cst_15 [1] : vector<2x64x128xf32> to vector<2x128xf32>
    %cst_16 = arith.constant 6.400000e+01 : f32
    %25 = vector.broadcast %cst_16 : f32 to vector<2x128xf32>
    %26 = arith.divf %24, %25 : vector<2x128xf32>
    %27 = arith.mulf %26, %15 : vector<2x128xf32>
    %28 = arith.truncf %15 : vector<2x128xf32> to vector<2x128xbf16>
    %c0_17 = arith.constant 0 : index
    %c0_18 = arith.constant 0 : index
    %29 = vector.load %arg6[%c0_17, %c0_18] : memref<128x128xbf16, #tpu.memory_space<vmem>>, vector<128x128xbf16>
    %cst_19 = arith.constant dense<0.000000e+00> : vector<2x128xf32>
    %30 = tpu.matmul %28, %29, %cst_19 {dimension_numbers = #tpu.dot_dimension_numbers<[1], [0], [0], [1], [0, 0, 1, 1], [], []>} : vector<2x128xbf16>, vector<128x128xbf16>, vector<2x128xf32> -> vector<2x128xf32>
    %c0_20 = arith.constant 0 : index
    %c0_21 = arith.constant 0 : index
    %31 = vector.load %arg7[%c0_20, %c0_21] : memref<1x128xf32, #tpu.memory_space<vmem>>, vector<1x128xf32>
    %32 = vector.broadcast %31 : vector<1x128xf32> to vector<2x128xf32>
    %33 = arith.addf %30, %32 : vector<2x128xf32>
    %34 = arith.truncf %22 : vector<128x128xf32> to vector<128x128xbf16>
    %c0_22 = arith.constant 0 : index
    %c0_23 = arith.constant 0 : index
    %35 = vector.load %arg8[%c0_22, %c0_23] : memref<128x128xbf16, #tpu.memory_space<vmem>>, vector<128x128xbf16>
    %cst_24 = arith.constant dense<0.000000e+00> : vector<128x128xf32>
    %36 = tpu.matmul %34, %35, %cst_24 {dimension_numbers = #tpu.dot_dimension_numbers<[1], [0], [0], [1], [0, 0, 1, 1], [], []>} : vector<128x128xbf16>, vector<128x128xbf16>, vector<128x128xf32> -> vector<128x128xf32>
    %c0_25 = arith.constant 0 : index
    %c0_26 = arith.constant 0 : index
    %37 = vector.load %arg9[%c0_25, %c0_26] : memref<1x128xf32, #tpu.memory_space<vmem>>, vector<1x128xf32>
    %38 = vector.broadcast %37 : vector<1x128xf32> to vector<128x128xf32>
    %39 = arith.addf %36, %38 : vector<128x128xf32>
    %40 = vector.shape_cast %39 : vector<128x128xf32> to vector<2x64x128xf32>
    %41 = vector.shape_cast %33 : vector<2x128xf32> to vector<2x1x128xf32>
    %42 = vector.broadcast %41 : vector<2x1x128xf32> to vector<2x64x128xf32>
    %43 = arith.addf %40, %42 : vector<2x64x128xf32>
    %44 = math.tanh %43 : vector<2x64x128xf32>
    %c0_27 = arith.constant 0 : index
    %c0_28 = arith.constant 0 : index
    %45 = vector.load %arg10[%c0_27, %c0_28] : memref<1x128xf32, #tpu.memory_space<vmem>>, vector<1x128xf32>
    %46 = vector.shape_cast %45 : vector<1x128xf32> to vector<1x1x128xf32>
    %47 = vector.broadcast %46 : vector<1x1x128xf32> to vector<2x64x128xf32>
    %48 = arith.mulf %44, %47 : vector<2x64x128xf32>
    %cst_29 = arith.constant dense<0.000000e+00> : vector<2x64xf32>
    %49 = vector.multi_reduction <add>, %48, %cst_29 [2] : vector<2x64x128xf32> to vector<2x64xf32>
    %50 = vector.shape_cast %49 : vector<2x64xf32> to vector<2x64x1xf32>
    %c0_30 = arith.constant 0 : index
    %c0_31 = arith.constant 0 : index
    %51 = vector.load %arg11[%c0_30, %c0_31] : memref<1x1xf32, #tpu.memory_space<vmem>>, vector<1x1xf32>
    %52 = vector.shape_cast %51 : vector<1x1xf32> to vector<1x1x1xf32>
    %53 = vector.broadcast %52 : vector<1x1x1xf32> to vector<2x64x1xf32>
    %54 = arith.addf %50, %53 : vector<2x64x1xf32>
    %cst_32 = arith.constant dense<0xFF800000> : vector<2x1xf32>
    %55 = vector.multi_reduction <maximumf>, %54, %cst_32 [1] : vector<2x64x1xf32> to vector<2x1xf32>
    %56 = vector.shape_cast %55 : vector<2x1xf32> to vector<2x1x1xf32>
    %57 = vector.broadcast %56 : vector<2x1x1xf32> to vector<2x64x1xf32>
    %58 = arith.subf %54, %57 : vector<2x64x1xf32>
    %59 = math.exp %58 : vector<2x64x1xf32>
    %cst_33 = arith.constant dense<0.000000e+00> : vector<2x1xf32>
    %60 = vector.multi_reduction <add>, %59, %cst_33 [1] : vector<2x64x1xf32> to vector<2x1xf32>
    %61 = vector.shape_cast %60 : vector<2x1xf32> to vector<2x1x1xf32>
    %62 = tpu.reciprocal %61 {approx = true} : vector<2x1x1xf32> -> vector<2x1x1xf32>
    %63 = vector.broadcast %62 : vector<2x1x1xf32> to vector<2x64x1xf32>
    %64 = arith.mulf %59, %63 : vector<2x64x1xf32>
    %65 = vector.broadcast %64 : vector<2x64x1xf32> to vector<2x64x128xf32>
    %66 = arith.mulf %23, %65 : vector<2x64x128xf32>
    %cst_34 = arith.constant dense<0.000000e+00> : vector<2x128xf32>
    %67 = vector.multi_reduction <add>, %66, %cst_34 [1] : vector<2x64x128xf32> to vector<2x128xf32>
    %cst_35 = arith.constant 6.400000e+01 : f32
    %68 = vector.broadcast %cst_35 : f32 to vector<2x128xf32>
    %69 = arith.divf %67, %68 : vector<2x128xf32>
    %c0_36 = arith.constant 0 : index
    %c0_37 = arith.constant 0 : index
    %70 = vector.load %arg12[%c0_36, %c0_37] : memref<128x8xf32, #tpu.memory_space<vmem>>, vector<128x8xf32>
    %cst_38 = arith.constant dense<0.000000e+00> : vector<2x8xf32>
    %71 = tpu.matmul %27, %70, %cst_38 {dimension_numbers = #tpu.dot_dimension_numbers<[1], [0], [0], [1], [0, 0, 1, 1], [], []>} : vector<2x128xf32>, vector<128x8xf32>, vector<2x8xf32> -> vector<2x8xf32>
    %c0_39 = arith.constant 0 : index
    %c0_40 = arith.constant 0 : index
    %72 = vector.load %arg13[%c0_39, %c0_40] : memref<128x8xf32, #tpu.memory_space<vmem>>, vector<128x8xf32>
    %cst_41 = arith.constant dense<0.000000e+00> : vector<2x8xf32>
    %73 = tpu.matmul %69, %72, %cst_41 {dimension_numbers = #tpu.dot_dimension_numbers<[1], [0], [0], [1], [0, 0, 1, 1], [], []>} : vector<2x128xf32>, vector<128x8xf32>, vector<2x8xf32> -> vector<2x8xf32>
    %74 = arith.addf %71, %73 : vector<2x8xf32>
    %c0_42 = arith.constant 0 : index
    %c0_43 = arith.constant 0 : index
    %75 = vector.load %arg14[%c0_42, %c0_43] : memref<1x8xf32, #tpu.memory_space<vmem>>, vector<1x8xf32>
    %76 = vector.broadcast %75 : vector<1x8xf32> to vector<2x8xf32>
    %77 = arith.addf %74, %76 : vector<2x8xf32>
    %c0_44 = arith.constant 0 : index
    %c0_45 = arith.constant 0 : index
    %c0_46 = arith.constant 0 : index
    %78 = vector.load %arg15[%c0_44, %c0_45, %c0_46] : memref<1x2x8xf32, #tpu.memory_space<vmem>>, vector<1x2x8xf32>
    %79 = vector.shape_cast %78 : vector<1x2x8xf32> to vector<2x8xf32>
    %80 = vector.shape_cast %77 : vector<2x8xf32> to vector<1x2x8xf32>
    tpu.vector_store %arg15[%c0_44, %c0_45, %c0_46], %80 {strides = array<i32>} : memref<1x2x8xf32, #tpu.memory_space<vmem>>, vector<1x2x8xf32>,
    return
  }
  func.func @transform_0(%arg0: i32) -> (i32, i32, i32) {
    %c0_i32 = arith.constant 0 : i32
    %c0_i32_0 = arith.constant 0 : i32
    %c0_i32_1 = arith.constant 0 : i32
    return %arg0, %c0_i32, %c0_i32_0 : i32, i32, i32
  }
  func.func @transform_1(%arg0: i32) -> (i32, i32) {
    %c0_i32 = arith.constant 0 : i32
    %c0_i32_0 = arith.constant 0 : i32
    %c0_i32_1 = arith.constant 0 : i32
    return %c0_i32, %c0_i32_0 : i32, i32
  }
  func.func @transform_2(%arg0: i32) -> (i32, i32) {
    %c0_i32 = arith.constant 0 : i32
    %c0_i32_0 = arith.constant 0 : i32
    %c0_i32_1 = arith.constant 0 : i32
    return %c0_i32, %c0_i32_0 : i32, i32
  }
  func.func @transform_3(%arg0: i32) -> (i32, i32) {
    %c0_i32 = arith.constant 0 : i32
    %c0_i32_0 = arith.constant 0 : i32
    %c0_i32_1 = arith.constant 0 : i32
    return %c0_i32, %c0_i32_0 : i32, i32
  }
  func.func @transform_4(%arg0: i32) -> (i32, i32) {
    %c0_i32 = arith.constant 0 : i32
    %c0_i32_0 = arith.constant 0 : i32
    %c0_i32_1 = arith.constant 0 : i32
    return %c0_i32, %c0_i32_0 : i32, i32
  }
  func.func @transform_5(%arg0: i32) -> (i32, i32) {
    %c0_i32 = arith.constant 0 : i32
    %c0_i32_0 = arith.constant 0 : i32
    %c0_i32_1 = arith.constant 0 : i32
    return %c0_i32, %c0_i32_0 : i32, i32
  }
  func.func @transform_6(%arg0: i32) -> (i32, i32) {
    %c0_i32 = arith.constant 0 : i32
    %c0_i32_0 = arith.constant 0 : i32
    %c0_i32_1 = arith.constant 0 : i32
    return %c0_i32, %c0_i32_0 : i32, i32
  }
  func.func @transform_7(%arg0: i32) -> (i32, i32) {
    %c0_i32 = arith.constant 0 : i32
    %c0_i32_0 = arith.constant 0 : i32
    %c0_i32_1 = arith.constant 0 : i32
    return %c0_i32, %c0_i32_0 : i32, i32
  }
  func.func @transform_8(%arg0: i32) -> (i32, i32) {
    %c0_i32 = arith.constant 0 : i32
    %c0_i32_0 = arith.constant 0 : i32
    %c0_i32_1 = arith.constant 0 : i32
    return %c0_i32, %c0_i32_0 : i32, i32
  }
  func.func @transform_9(%arg0: i32) -> (i32, i32) {
    %c0_i32 = arith.constant 0 : i32
    %c0_i32_0 = arith.constant 0 : i32
    %c0_i32_1 = arith.constant 0 : i32
    return %c0_i32, %c0_i32_0 : i32, i32
  }
  func.func @transform_10(%arg0: i32) -> (i32, i32) {
    %c0_i32 = arith.constant 0 : i32
    %c0_i32_0 = arith.constant 0 : i32
    %c0_i32_1 = arith.constant 0 : i32
    return %c0_i32, %c0_i32_0 : i32, i32
  }
  func.func @transform_11(%arg0: i32) -> (i32, i32) {
    %c0_i32 = arith.constant 0 : i32
    %c0_i32_0 = arith.constant 0 : i32
    %c0_i32_1 = arith.constant 0 : i32
    return %c0_i32, %c0_i32_0 : i32, i32
  }
  func.func @transform_12(%arg0: i32) -> (i32, i32) {
    %c0_i32 = arith.constant 0 : i32
    %c0_i32_0 = arith.constant 0 : i32
    %c0_i32_1 = arith.constant 0 : i32
    return %c0_i32, %c0_i32_0 : i32, i32
  }
  func.func @transform_13(%arg0: i32) -> (i32, i32) {
    %c0_i32 = arith.constant 0 : i32
    %c0_i32_0 = arith.constant 0 : i32
    %c0_i32_1 = arith.constant 0 : i32
    return %c0_i32, %c0_i32_0 : i32, i32
  }
  func.func @transform_14(%arg0: i32) -> (i32, i32, i32) {
    %c0_i32 = arith.constant 0 : i32
    %c0_i32_0 = arith.constant 0 : i32
    %c0_i32_1 = arith.constant 0 : i32
    return %arg0, %c0_i32, %c0_i32_0 : i32, i32, i32
  }
}

</mosaic_0001>

<llo_original>
// kernel: pdanet_forward.1
$region0: #{pdanet_forward.1}
  #allocation0 [shape = 'u32[]', space=smem, size = 0x4, offset = 0x4, fixed_abs, tag = 'smem constant byte address 0x4 - core index']
  #allocation1 [shape = 'u32[72,128]{1,0:T(1,128)}', space=vmem, size = 0x9000, scoped, tag = 'internal scratch']
  #allocation2 [shape = 'f32[1,1]{1,0:T(1,128)S(1)}', space=vmem, size = 0x200, scoped, tag = 'scoped memory for pdanet_forward.1']
  %s0 = inlined_call_operand.vmem [shape: bf16[2,64,128], index: 0, kind: input, shape index: {}]
  %s1 = inlined_call_operand.vmem [shape: bf16[128,128], index: 1, kind: input, shape index: {}]
  %s2 = inlined_call_operand.vmem [shape: f32[1,128], index: 2, kind: input, shape index: {}]
  %s3 = inlined_call_operand.vmem [shape: bf16[128,128], index: 3, kind: input, shape index: {}]
  %s4 = inlined_call_operand.vmem [shape: f32[1,128], index: 4, kind: input, shape index: {}]
  %s5 = inlined_call_operand.vmem [shape: bf16[128,128], index: 5, kind: input, shape index: {}]
  %s6 = inlined_call_operand.vmem [shape: f32[1,128], index: 6, kind: input, shape index: {}]
  %s7 = inlined_call_operand.vmem [shape: bf16[128,128], index: 7, kind: input, shape index: {}]
  %s8 = inlined_call_operand.vmem [shape: f32[1,128], index: 8, kind: input, shape index: {}]
  %s9 = inlined_call_operand.vmem [shape: f32[1,128], index: 9, kind: input, shape index: {}]
  %s10 = inlined_call_operand.<no memory space> [shape: f32[1,1], index: 10, kind: input, shape index: {}]
  %s11 = inlined_call_operand.vmem [shape: f32[128,8], index: 11, kind: input, shape index: {}]
  %s12 = inlined_call_operand.vmem [shape: f32[128,8], index: 12, kind: input, shape index: {}]
  %s13 = inlined_call_operand.vmem [shape: f32[1,8], index: 13, kind: input, shape index: {}]
  %s14 = inlined_call_operand.hbm [shape: f32[1,2,8], index: 14, kind: output, shape index: {}]
  %s15 = sld [smem:[#allocation0]]
  $region66: #{pdanet_forward.1} parent=0
    _
  %s17 = ssub.s32 1, %s15
  %s18 = scalar_select 0, %s17, %s15
  %v19 = vstv %s10
  %20 = vst [vmem:[#allocation2] sm:$0x1] %v19
  $region1: #{pdanet_forward.1} parent=0
    #allocation3 [shape = 'u8[1024]{0}', space=vmem, size = 0x400, scoped, tag = 'output window, operand 0, single buffered']
    #allocation4 [shape = 's32[1]{0}', space=sflag, size = 0x4, scoped, tag = 'scoped memory for pdanet_forward.1']
    %21 = vsyncpa [#allocation4], 0
    // Predicated region
    $region2: #{pdanet_forward.1} parent=1 // pred_check
      _
    $region3: #{pdanet_forward.1} parent=1 // pred_check_branch
      %23 = sbr.rel (0) target = $region5
    $region4: #{pdanet_forward.1} parent=1 // pred_region
      _
    $region5: #{pdanet_forward.1} parent=1 // pred_fallthru
      _
    // Predicated region
    $region6: #{pdanet_forward.1} parent=1 // pred_check
      _
    $region7: #{pdanet_forward.1} parent=1 // pred_check_branch
      %25 = sbr.rel (0) target = $region9
    $region8: #{pdanet_forward.1} parent=1 // pred_region
      _
    $region9: #{pdanet_forward.1} parent=1 // pred_fallthru
      _
    // Predicated region
    $region10: #{pdanet_forward.1} parent=1 // pred_check
      _
    $region11: #{pdanet_forward.1} parent=1 // pred_check_branch
      %27 = sbr.rel (0) target = $region13
    $region12: #{pdanet_forward.1} parent=1 // pred_region
      _
    $region13: #{pdanet_forward.1} parent=1 // pred_fallthru
      _
    // Predicated region
    $region14: #{pdanet_forward.1} parent=1 // pred_check
      _
    $region15: #{pdanet_forward.1} parent=1 // pred_check_branch
      %29 = sbr.rel (0) target = $region17
    $region16: #{pdanet_forward.1} parent=1 // pred_region
      _
    $region17: #{pdanet_forward.1} parent=1 // pred_fallthru
      _
    // Predicated region
    $region18: #{pdanet_forward.1} parent=1 // pred_check
      _
    $region19: #{pdanet_forward.1} parent=1 // pred_check_branch
      %31 = sbr.rel (0) target = $region21
    $region20: #{pdanet_forward.1} parent=1 // pred_region
      _
    $region21: #{pdanet_forward.1} parent=1 // pred_fallthru
      _
    // Predicated region
    $region22: #{pdanet_forward.1} parent=1 // pred_check
      _
    $region23: #{pdanet_forward.1} parent=1 // pred_check_branch
      %33 = sbr.rel (0) target = $region25
    $region24: #{pdanet_forward.1} parent=1 // pred_region
      _
    $region25: #{pdanet_forward.1} parent=1 // pred_fallthru
      _
    // Predicated region
    $region26: #{pdanet_forward.1} parent=1 // pred_check
      _
    $region27: #{pdanet_forward.1} parent=1 // pred_check_branch
      %35 = sbr.rel (0) target = $region29
    $region28: #{pdanet_forward.1} parent=1 // pred_region
      _
    $region29: #{pdanet_forward.1} parent=1 // pred_fallthru
      _
    // Predicated region
    $region30: #{pdanet_forward.1} parent=1 // pred_check
      _
    $region31: #{pdanet_forward.1} parent=1 // pred_check_branch
      %37 = sbr.rel (0) target = $region33
    $region32: #{pdanet_forward.1} parent=1 // pred_region
      _
    $region33: #{pdanet_forward.1} parent=1 // pred_fallthru
      _
    // Predicated region
    $region34: #{pdanet_forward.1} parent=1 // pred_check
      _
    $region35: #{pdanet_forward.1} parent=1 // pred_check_branch
      %39 = sbr.rel (0) target = $region37
    $region36: #{pdanet_forward.1} parent=1 // pred_region
      _
    $region37: #{pdanet_forward.1} parent=1 // pred_fallthru
      _
    // Predicated region
    $region38: #{pdanet_forward.1} parent=1 // pred_check
      _
    $region39: #{pdanet_forward.1} parent=1 // pred_check_branch
      %41 = sbr.rel (0) target = $region41
    $region40: #{pdanet_forward.1} parent=1 // pred_region
      _
    $region41: #{pdanet_forward.1} parent=1 // pred_fallthru
      _
    // Predicated region
    $region42: #{pdanet_forward.1} parent=1 // pred_check
      _
    $region43: #{pdanet_forward.1} parent=1 // pred_check_branch
      %43 = sbr.rel (0) target = $region45
    $region44: #{pdanet_forward.1} parent=1 // pred_region
      _
    $region45: #{pdanet_forward.1} parent=1 // pred_fallthru
      _
    // Predicated region
    $region46: #{pdanet_forward.1} parent=1 // pred_check
      _
    $region47: #{pdanet_forward.1} parent=1 // pred_check_branch
      %45 = sbr.rel (0) target = $region49
    $region48: #{pdanet_forward.1} parent=1 // pred_region
      _
    $region49: #{pdanet_forward.1} parent=1 // pred_fallthru
      _
    // Predicated region
    $region50: #{pdanet_forward.1} parent=1 // pred_check
      _
    $region51: #{pdanet_forward.1} parent=1 // pred_check_branch
      %47 = sbr.rel (0) target = $region53
    $region52: #{pdanet_forward.1} parent=1 // pred_region
      _
    $region53: #{pdanet_forward.1} parent=1 // pred_fallthru
      _
    // Predicated region
    $region54: #{pdanet_forward.1} parent=1 // pred_check
      _
    $region55: #{pdanet_forward.1} parent=1 // pred_check_branch
      %49 = sbr.rel (0) target = $region57
    $region56: #{pdanet_forward.1} parent=1 // pred_region
      _
    $region57: #{pdanet_forward.1} parent=1 // pred_fallthru
      _
    %v50 = vld [vmem:[%s0] sm:$0xf]
    %v51 = vld [vmem:[%s0 + $0x4] sm:$0xf]
    %v52 = vld [vmem:[%s0 + $0x8] sm:$0xf]
    %v53 = vld [vmem:[%s0 + $0xc] sm:$0xf]
    %v54 = vld [vmem:[%s0 + $0x10] sm:$0xf]
    %v55 = vld [vmem:[%s0 + $0x14] sm:$0xf]
    %v56 = vld [vmem:[%s0 + $0x18] sm:$0xf]
    %v57 = vld [vmem:[%s0 + $0x1c] sm:$0xf]
    %v58 = vld [vmem:[%s0 + $0x20] sm:$0xf]
    %v59 = vld [vmem:[%s0 + $0x24] sm:$0xf]
    %v60 = vld [vmem:[%s0 + $0x28] sm:$0xf]
    %v61 = vld [vmem:[%s0 + $0x2c] sm:$0xf]
    %v62 = vld [vmem:[%s0 + $0x30] sm:$0xf]
    %v63 = vld [vmem:[%s0 + $0x34] sm:$0xf]
    %v64 = vld [vmem:[%s0 + $0x38] sm:$0xf]
    %v65 = vld [vmem:[%s0 + $0x3c] sm:$0xf]
    %v66 = vld [vmem:[%s1] sm:$0xf]
    %v67 = vld [vmem:[%s1 + $0x4] sm:$0xf]
    %v68 = vld [vmem:[%s1 + $0x8] sm:$0xf]
    %v69 = vld [vmem:[%s1 + $0xc] sm:$0xf]
    %v70 = vld [vmem:[%s1 + $0x10] sm:$0xf]
    %v71 = vld [vmem:[%s1 + $0x14] sm:$0xf]
    %v72 = vld [vmem:[%s1 + $0x18] sm:$0xf]
    %v73 = vld [vmem:[%s1 + $0x1c] sm:$0xf]
    %v74 = vld [vmem:[%s1 + $0x20] sm:$0xf]
    %v75 = vld [vmem:[%s1 + $0x24] sm:$0xf]
    %v76 = vld [vmem:[%s1 + $0x28] sm:$0xf]
    %v77 = vld [vmem:[%s1 + $0x2c] sm:$0xf]
    %v78 = vld [vmem:[%s1 + $0x30] sm:$0xf]
    %v79 = vld [vmem:[%s1 + $0x34] sm:$0xf]
    %v80 = vld [vmem:[%s1 + $0x38] sm:$0xf]
    %v81 = vld [vmem:[%s1 + $0x3c] sm:$0xf]
    %v82 = vld [vmem:[%s2] sm:$0x1]
    %v84 = vperm.slane %v82, 0
    %v102 = vunpack.c.l.b16 %v50
    %v103 = vunpack.c.l.b16 %v51
    %v104 = vunpack.c.l.b16 %v52
    %v105 = vunpack.c.l.b16 %v53
    %v106 = vunpack.c.l.b16 %v54
    %v107 = vunpack.c.l.b16 %v55
    %v108 = vunpack.c.l.b16 %v56
    %v109 = vunpack.c.l.b16 %v57
    %v110 = vunpack.c.l.b16 %v58
    %v111 = vunpack.c.l.b16 %v59
    %v112 = vunpack.c.l.b16 %v60
    %v113 = vunpack.c.l.b16 %v61
    %v114 = vunpack.c.l.b16 %v62
    %v115 = vunpack.c.l.b16 %v63
    %v116 = vunpack.c.l.b16 %v64
    %v117 = vunpack.c.l.b16 %v65
    %v118 = vpack.c.b16 %v103, %v102
    %v119 = vpack.c.b16 %v105, %v104
    %v120 = vpack.c.b16 %v107, %v106
    %v121 = vpack.c.b16 %v109, %v108
    %v122 = vpack.c.b16 %v111, %v110
    %v123 = vpack.c.b16 %v113, %v112
    %v124 = vpack.c.b16 %v115, %v114
    %v125 = vpack.c.b16 %v117, %v116
    %v150 = vunpack.c.l.b16 %v66
    %v151 = vunpack.c.l.b16 %v67
    %v152 = vunpack.c.l.b16 %v68
    %v153 = vunpack.c.l.b16 %v69
    %v154 = vunpack.c.l.b16 %v70
    %v155 = vunpack.c.l.b16 %v71
    %v156 = vunpack.c.l.b16 %v72
    %v157 = vunpack.c.l.b16 %v73
    %v158 = vunpack.c.l.b16 %v74
    %v159 = vunpack.c.l.b16 %v75
    %v160 = vunpack.c.l.b16 %v76
    %v161 = vunpack.c.l.b16 %v77
    %v162 = vunpack.c.l.b16 %v78
    %v163 = vunpack.c.l.b16 %v79
    %v164 = vunpack.c.l.b16 %v80
    %v165 = vunpack.c.l.b16 %v81
    %v166 = vpack.c.b16 %v151, %v150
    %v167 = vpack.c.b16 %v153, %v152
    %v168 = vpack.c.b16 %v155, %v154
    %v169 = vpack.c.b16 %v157, %v156
    %v170 = vpack.c.b16 %v159, %v158
    %v171 = vpack.c.b16 %v161, %v160
    %v172 = vpack.c.b16 %v163, %v162
    %v173 = vpack.c.b16 %v165, %v164
    %182 = vmatpush.bf16.msra.mxu0 %v173
    %183 = vmatpush.bf16.msra.mxu0 %v172
    %184 = vmatpush.bf16.msra.mxu0 %v171
    %185 = vmatpush.bf16.msra.mxu0 %v170
    %186 = vmatpush.bf16.msra.mxu0 %v169
    %187 = vmatpush.bf16.msra.mxu0 %v168
    %188 = vmatpush.bf16.msra.mxu0 %v167
    %189 = vmatpush.bf16.msra.mxu0 %v166
    %190 = vmatmul.bf16.gmra.mxu0 %v118
    %v191 = vpop.f32.mrf.mxu0
    %v192 = vadd.f32 %v84, %v191
    %v193 = vpop.f32.mrf.mxu0
    %v194 = vadd.f32 %v84, %v193
    %195 = vmatmul.bf16.gmra.mxu0 %v119
    %v196 = vpop.f32.mrf.mxu0
    %v197 = vadd.f32 %v84, %v196
    %v198 = vpop.f32.mrf.mxu0
    %v199 = vadd.f32 %v84, %v198
    %200 = vmatmul.bf16.gmra.mxu0 %v120
    %v201 = vpop.f32.mrf.mxu0
    %v202 = vadd.f32 %v84, %v201
    %v203 = vpop.f32.mrf.mxu0
    %v204 = vadd.f32 %v84, %v203
    %205 = vmatmul.bf16.gmra.mxu0 %v121
    %v206 = vpop.f32.mrf.mxu0
    %v207 = vadd.f32 %v84, %v206
    %v208 = vpop.f32.mrf.mxu0
    %v209 = vadd.f32 %v84, %v208
    %210 = vmatmul.bf16.gmra.mxu0 %v122
    %v211 = vpop.f32.mrf.mxu0
    %v212 = vadd.f32 %v84, %v211
    %v213 = vpop.f32.mrf.mxu0
    %v214 = vadd.f32 %v84, %v213
    %215 = vmatmul.bf16.gmra.mxu0 %v123
    %v216 = vpop.f32.mrf.mxu0
    %v217 = vadd.f32 %v84, %v216
    %v218 = vpop.f32.mrf.mxu0
    %v219 = vadd.f32 %v84, %v218
    %220 = vmatmul.bf16.gmra.mxu0 %v124
    %v221 = vpop.f32.mrf.mxu0
    %v222 = vadd.f32 %v84, %v221
    %v223 = vpop.f32.mrf.mxu0
    %v224 = vadd.f32 %v84, %v223
    %225 = vmatmul.bf16.gmra.mxu0 %v125
    %v226 = vpop.f32.mrf.mxu0
    %v227 = vadd.f32 %v84, %v226
    %v228 = vpop.f32.mrf.mxu0
    %v229 = vadd.f32 %v84, %v228
    %230 = vdwg.mxu0
    %v231 = vxor.u32 %v192, 2147483648
    %v232 = vxor.u32 %v194, 2147483648
    %v233 = vxor.u32 %v197, 2147483648
    %v234 = vxor.u32 %v199, 2147483648
    %v235 = vxor.u32 %v202, 2147483648
    %v236 = vxor.u32 %v204, 2147483648
    %v237 = vxor.u32 %v207, 2147483648
    %v238 = vxor.u32 %v209, 2147483648
    %v239 = vxor.u32 %v212, 2147483648
    %v240 = vxor.u32 %v214, 2147483648
    %v241 = vxor.u32 %v217, 2147483648
    %v242 = vxor.u32 %v219, 2147483648
    %v243 = vxor.u32 %v222, 2147483648
    %v244 = vxor.u32 %v224, 2147483648
    %v245 = vxor.u32 %v227, 2147483648
    %v246 = vxor.u32 %v229, 2147483648
    %v247 = vmul.f32 %v231, 1.442695
    %v248 = vpow.pop %v247
    %v249 = vmul.f32 %v232, 1.442695
    %v250 = vpow.pop %v249
    %v251 = vmul.f32 %v233, 1.442695
    %v252 = vpow.pop %v251
    %v253 = vmul.f32 %v234, 1.442695
    %v254 = vpow.pop %v253
    %v255 = vmul.f32 %v235, 1.442695
    %v256 = vpow.pop %v255
    %v257 = vmul.f32 %v236, 1.442695
    %v258 = vpow.pop %v257
    %v259 = vmul.f32 %v237, 1.442695
    %v260 = vpow.pop %v259
    %v261 = vmul.f32 %v238, 1.442695
    %v262 = vpow.pop %v261
    %v263 = vmul.f32 %v239, 1.442695
    %v264 = vpow.pop %v263
    %v265 = vmul.f32 %v240, 1.442695
    %v266 = vpow.pop %v265
    %v267 = vmul.f32 %v241, 1.442695
    %v268 = vpow.pop %v267
    %v269 = vmul.f32 %v242, 1.442695
    %v270 = vpow.pop %v269
    %v271 = vmul.f32 %v243, 1.442695
    %v272 = vpow.pop %v271
    %v273 = vmul.f32 %v244, 1.442695
    %v274 = vpow.pop %v273
    %v275 = vmul.f32 %v245, 1.442695
    %v276 = vpow.pop %v275
    %v277 = vmul.f32 %v246, 1.442695
    %v278 = vpow.pop %v277
    %v279 = vadd.f32 %v248, 1.0
    %v280 = vadd.f32 %v250, 1.0
    %v281 = vadd.f32 %v252, 1.0
    %v282 = vadd.f32 %v254, 1.0
    %v283 = vadd.f32 %v256, 1.0
    %v284 = vadd.f32 %v258, 1.0
    %v285 = vadd.f32 %v260, 1.0
    %v286 = vadd.f32 %v262, 1.0
    %v287 = vadd.f32 %v264, 1.0
    %v288 = vadd.f32 %v266, 1.0
    %v289 = vadd.f32 %v268, 1.0
    %v290 = vadd.f32 %v270, 1.0
    %v291 = vadd.f32 %v272, 1.0
    %v292 = vadd.f32 %v274, 1.0
    %v293 = vadd.f32 %v276, 1.0
    %v294 = vadd.f32 %v278, 1.0
    %v295 = vrcp.pop %v279
    %v296 = vmul.f32 %v279, %v295
    %v297 = vsub.f32 1.0, %v296
    %v298 = vmul.f32 %v295, %v297
    %v299 = vadd.f32 %v295, %v298
    %vm300 = vweird.f32 %v279
    %vm301 = vweird.f32 %v295
    %vm302 = vmor %vm300, %vm301
    %v303 = vsel %vm302, %v295, %v299
    %v304 = vand.u32 2147483647, %v279
    %vm305 = vcmp.eq.f32.partialorder %v304, 8.507059e+37
    %v306 = vand.u32 %v279, 2147483648
    %v307 = vor.u32 1.1754944e-38, %v306
    %v308 = vsel %vm305, %v307, %v303
    %v309 = vmul.f32 1.0, %v308
    %v310 = vrcp.pop %v280
    %v311 = vmul.f32 %v280, %v310
    %v312 = vsub.f32 1.0, %v311
    %v313 = vmul.f32 %v310, %v312
    %v314 = vadd.f32 %v310, %v313
    %vm315 = vweird.f32 %v280
    %vm316 = vweird.f32 %v310
    %vm317 = vmor %vm315, %vm316
    %v318 = vsel %vm317, %v310, %v314
    %v319 = vand.u32 2147483647, %v280
    %vm320 = vcmp.eq.f32.partialorder %v319, 8.507059e+37
    %v321 = vand.u32 %v280, 2147483648
    %v322 = vor.u32 1.1754944e-38, %v321
    %v323 = vsel %vm320, %v322, %v318
    %v324 = vmul.f32 1.0, %v323
    %v325 = vrcp.pop %v281
    %v326 = vmul.f32 %v281, %v325
    %v327 = vsub.f32 1.0, %v326
    %v328 = vmul.f32 %v325, %v327
    %v329 = vadd.f32 %v325, %v328
    %vm330 = vweird.f32 %v281
    %vm331 = vweird.f32 %v325
    %vm332 = vmor %vm330, %vm331
    %v333 = vsel %vm332, %v325, %v329
    %v334 = vand.u32 2147483647, %v281
    %vm335 = vcmp.eq.f32.partialorder %v334, 8.507059e+37
    %v336 = vand.u32 %v281, 2147483648
    %v337 = vor.u32 1.1754944e-38, %v336
    %v338 = vsel %vm335, %v337, %v333
    %v339 = vmul.f32 1.0, %v338
    %v340 = vrcp.pop %v282
    %v341 = vmul.f32 %v282, %v340
    %v342 = vsub.f32 1.0, %v341
    %v343 = vmul.f32 %v340, %v342
    %v344 = vadd.f32 %v340, %v343
    %vm345 = vweird.f32 %v282
    %vm346 = vweird.f32 %v340
    %vm347 = vmor %vm345, %vm346
    %v348 = vsel %vm347, %v340, %v344
    %v349 = vand.u32 2147483647, %v282
    %vm350 = vcmp.eq.f32.partialorder %v349, 8.507059e+37
    %v351 = vand.u32 %v282, 2147483648
    %v352 = vor.u32 1.1754944e-38, %v351
    %v353 = vsel %vm350, %v352, %v348
    %v354 = vmul.f32 1.0, %v353
    %v355 = vrcp.pop %v283
    %v356 = vmul.f32 %v283, %v355
    %v357 = vsub.f32 1.0, %v356
    %v358 = vmul.f32 %v355, %v357
    %v359 = vadd.f32 %v355, %v358
    %vm360 = vweird.f32 %v283
    %vm361 = vweird.f32 %v355
    %vm362 = vmor %vm360, %vm361
    %v363 = vsel %vm362, %v355, %v359
    %v364 = vand.u32 2147483647, %v283
    %vm365 = vcmp.eq.f32.partialorder %v364, 8.507059e+37
    %v366 = vand.u32 %v283, 2147483648
    %v367 = vor.u32 1.1754944e-38, %v366
    %v368 = vsel %vm365, %v367, %v363
    %v369 = vmul.f32 1.0, %v368
    %v370 = vrcp.pop %v284
    %v371 = vmul.f32 %v284, %v370
    %v372 = vsub.f32 1.0, %v371
    %v373 = vmul.f32 %v370, %v372
    %v374 = vadd.f32 %v370, %v373
    %vm375 = vweird.f32 %v284
    %vm376 = vweird.f32 %v370
    %vm377 = vmor %vm375, %vm376
    %v378 = vsel %vm377, %v370, %v374
    %v379 = vand.u32 2147483647, %v284
    %vm380 = vcmp.eq.f32.partialorder %v379, 8.507059e+37
    %v381 = vand.u32 %v284, 2147483648
    %v382 = vor.u32 1.1754944e-38, %v381
    %v383 = vsel %vm380, %v382, %v378
    %v384 = vmul.f32 1.0, %v383
    %v385 = vrcp.pop %v285
    %v386 = vmul.f32 %v285, %v385
    %v387 = vsub.f32 1.0, %v386
    %v388 = vmul.f32 %v385, %v387
    %v389 = vadd.f32 %v385, %v388
    %vm390 = vweird.f32 %v285
    %vm391 = vweird.f32 %v385
    %vm392 = vmor %vm390, %vm391
    %v393 = vsel %vm392, %v385, %v389
    %v394 = vand.u32 2147483647, %v285
    %vm395 = vcmp.eq.f32.partialorder %v394, 8.507059e+37
    %v396 = vand.u32 %v285, 2147483648
    %v397 = vor.u32 1.1754944e-38, %v396
    %v398 = vsel %vm395, %v397, %v393
    %v399 = vmul.f32 1.0, %v398
    %v400 = vrcp.pop %v286
    %v401 = vmul.f32 %v286, %v400
    %v402 = vsub.f32 1.0, %v401
    %v403 = vmul.f32 %v400, %v402
    %v404 = vadd.f32 %v400, %v403
    %vm405 = vweird.f32 %v286
    %vm406 = vweird.f32 %v400
    %vm407 = vmor %vm405, %vm406
    %v408 = vsel %vm407, %v400, %v404
    %v409 = vand.u32 2147483647, %v286
    %vm410 = vcmp.eq.f32.partialorder %v409, 8.507059e+37
    %v411 = vand.u32 %v286, 2147483648
    %v412 = vor.u32 1.1754944e-38, %v411
    %v413 = vsel %vm410, %v412, %v408
    %v414 = vmul.f32 1.0, %v413
    %v415 = vrcp.pop %v287
    %v416 = vmul.f32 %v287, %v415
    %v417 = vsub.f32 1.0, %v416
    %v418 = vmul.f32 %v415, %v417
    %v419 = vadd.f32 %v415, %v418
    %vm420 = vweird.f32 %v287
    %vm421 = vweird.f32 %v415
    %vm422 = vmor %vm420, %vm421
    %v423 = vsel %vm422, %v415, %v419
    %v424 = vand.u32 2147483647, %v287
    %vm425 = vcmp.eq.f32.partialorder %v424, 8.507059e+37
    %v426 = vand.u32 %v287, 2147483648
    %v427 = vor.u32 1.1754944e-38, %v426
    %v428 = vsel %vm425, %v427, %v423
    %v429 = vmul.f32 1.0, %v428
    %v430 = vrcp.pop %v288
    %v431 = vmul.f32 %v288, %v430
    %v432 = vsub.f32 1.0, %v431
    %v433 = vmul.f32 %v430, %v432
    %v434 = vadd.f32 %v430, %v433
    %vm435 = vweird.f32 %v288
    %vm436 = vweird.f32 %v430
    %vm437 = vmor %vm435, %vm436
    %v438 = vsel %vm437, %v430, %v434
    %v439 = vand.u32 2147483647, %v288
    %vm440 = vcmp.eq.f32.partialorder %v439, 8.507059e+37
    %v441 = vand.u32 %v288, 2147483648
    %v442 = vor.u32 1.1754944e-38, %v441
    %v443 = vsel %vm440, %v442, %v438
    %v444 = vmul.f32 1.0, %v443
    %v445 = vrcp.pop %v289
    %v446 = vmul.f32 %v289, %v445
    %v447 = vsub.f32 1.0, %v446
    %v448 = vmul.f32 %v445, %v447
    %v449 = vadd.f32 %v445, %v448
    %vm450 = vweird.f32 %v289
    %vm451 = vweird.f32 %v445
    %vm452 = vmor %vm450, %vm451
    %v453 = vsel %vm452, %v445, %v449
    %v454 = vand.u32 2147483647, %v289
    %vm455 = vcmp.eq.f32.partialorder %v454, 8.507059e+37
    %v456 = vand.u32 %v289, 2147483648
    %v457 = vor.u32 1.1754944e-38, %v456
    %v458 = vsel %vm455, %v457, %v453
    %v459 = vmul.f32 1.0, %v458
    %v460 = vrcp.pop %v290
    %v461 = vmul.f32 %v290, %v460
    %v462 = vsub.f32 1.0, %v461
    %v463 = vmul.f32 %v460, %v462
    %v464 = vadd.f32 %v460, %v463
    %vm465 = vweird.f32 %v290
    %vm466 = vweird.f32 %v460
    %vm467 = vmor %vm465, %vm466
    %v468 = vsel %vm467, %v460, %v464
    %v469 = vand.u32 2147483647, %v290
    %vm470 = vcmp.eq.f32.partialorder %v469, 8.507059e+37
    %v471 = vand.u32 %v290, 2147483648
    %v472 = vor.u32 1.1754944e-38, %v471
    %v473 = vsel %vm470, %v472, %v468
    %v474 = vmul.f32 1.0, %v473
    %v475 = vrcp.pop %v291
    %v476 = vmul.f32 %v291, %v475
    %v477 = vsub.f32 1.0, %v476
    %v478 = vmul.f32 %v475, %v477
    %v479 = vadd.f32 %v475, %v478
    %vm480 = vweird.f32 %v291
    %vm481 = vweird.f32 %v475
    %vm482 = vmor %vm480, %vm481
    %v483 = vsel %vm482, %v475, %v479
    %v484 = vand.u32 2147483647, %v291
    %vm485 = vcmp.eq.f32.partialorder %v484, 8.507059e+37
    %v486 = vand.u32 %v291, 2147483648
    %v487 = vor.u32 1.1754944e-38, %v486
    %v488 = vsel %vm485, %v487, %v483
    %v489 = vmul.f32 1.0, %v488
    %v490 = vrcp.pop %v292
    %v491 = vmul.f32 %v292, %v490
    %v492 = vsub.f32 1.0, %v491
    %v493 = vmul.f32 %v490, %v492
    %v494 = vadd.f32 %v490, %v493
    %vm495 = vweird.f32 %v292
    %vm496 = vweird.f32 %v490
    %vm497 = vmor %vm495, %vm496
    %v498 = vsel %vm497, %v490, %v494
    %v499 = vand.u32 2147483647, %v292
    %vm500 = vcmp.eq.f32.partialorder %v499, 8.507059e+37
    %v501 = vand.u32 %v292, 2147483648
    %v502 = vor.u32 1.1754944e-38, %v501
    %v503 = vsel %vm500, %v502, %v498
    %v504 = vmul.f32 1.0, %v503
    %v505 = vrcp.pop %v293
    %v506 = vmul.f32 %v293, %v505
    %v507 = vsub.f32 1.0, %v506
    %v508 = vmul.f32 %v505, %v507
    %v509 = vadd.f32 %v505, %v508
    %vm510 = vweird.f32 %v293
    %vm511 = vweird.f32 %v505
    %vm512 = vmor %vm510, %vm511
    %v513 = vsel %vm512, %v505, %v509
    %v514 = vand.u32 2147483647, %v293
    %vm515 = vcmp.eq.f32.partialorder %v514, 8.507059e+37
    %v516 = vand.u32 %v293, 2147483648
    %v517 = vor.u32 1.1754944e-38, %v516
    %v518 = vsel %vm515, %v517, %v513
    %v519 = vmul.f32 1.0, %v518
    %v520 = vrcp.pop %v294
    %v521 = vmul.f32 %v294, %v520
    %v522 = vsub.f32 1.0, %v521
    %v523 = vmul.f32 %v520, %v522
    %v524 = vadd.f32 %v520, %v523
    %vm525 = vweird.f32 %v294
    %vm526 = vweird.f32 %v520
    %vm527 = vmor %vm525, %vm526
    %v528 = vsel %vm527, %v520, %v524
    %v529 = vand.u32 2147483647, %v294
    %vm530 = vcmp.eq.f32.partialorder %v529, 8.507059e+37
    %v531 = vand.u32 %v294, 2147483648
    %v532 = vor.u32 1.1754944e-38, %v531
    %v533 = vsel %vm530, %v532, %v528
    %v534 = vmul.f32 1.0, %v533
    %v535 = vadd.f32 %v309, %v324
    %v536 = vadd.f32 %v535, %v339
    %v537 = vadd.f32 %v536, %v354
    %v538 = vadd.f32 %v537, %v369
    %v539 = vadd.f32 %v538, %v384
    %v540 = vadd.f32 %v539, %v399
    %v541 = vadd.f32 %v540, %v414
    %v542 = vrot.slane %v541, 4
    %v543 = vadd.f32 %v541, %v542
    %v544 = vrot.slane %v543, 2
    %v545 = vadd.f32 %v543, %v544
    %v546 = vrot.slane %v545, 1
    %v547 = vadd.f32 %v545, %v546
    %v548 = vadd.f32 %v429, %v444
    %v549 = vadd.f32 %v548, %v459
    %v550 = vadd.f32 %v549, %v474
    %v551 = vadd.f32 %v550, %v489
    %v552 = vadd.f32 %v551, %v504
    %v553 = vadd.f32 %v552, %v519
    %v554 = vadd.f32 %v553, %v534
    %v555 = vrot.slane %v554, 4
    %v556 = vadd.f32 %v554, %v555
    %v557 = vrot.slane %v556, 2
    %v558 = vadd.f32 %v556, %v557
    %v559 = vrot.slane %v558, 1
    %v560 = vadd.f32 %v558, %v559
    %v561 = vrcp.pop 64.0
    %v562 = vmul.f32 64.0, %v561
    %v563 = vsub.f32 1.0, %v562
    %v564 = vmul.f32 %v561, %v563
    %v565 = vadd.f32 %v561, %v564
    %vm566 = vweird.f32 %v561
    %v567 = vsel %vm566, %v561, %v565
    %v568 = vmul.f32 %v547, %v567
    %v569 = vmul.f32 %v560, %v567
    %v570 = vld [vmem:[%s3] sm:$0xf]
    %v571 = vld [vmem:[%s3 + $0x4] sm:$0xf]
    %v572 = vld [vmem:[%s3 + $0x8] sm:$0xf]
    %v573 = vld [vmem:[%s3 + $0xc] sm:$0xf]
    %v574 = vld [vmem:[%s3 + $0x10] sm:$0xf]
    %v575 = vld [vmem:[%s3 + $0x14] sm:$0xf]
    %v576 = vld [vmem:[%s3 + $0x18] sm:$0xf]
    %v577 = vld [vmem:[%s3 + $0x1c] sm:$0xf]
    %v578 = vld [vmem:[%s3 + $0x20] sm:$0xf]
    %v579 = vld [vmem:[%s3 + $0x24] sm:$0xf]
    %v580 = vld [vmem:[%s3 + $0x28] sm:$0xf]
    %v581 = vld [vmem:[%s3 + $0x2c] sm:$0xf]
    %v582 = vld [vmem:[%s3 + $0x30] sm:$0xf]
    %v583 = vld [vmem:[%s3 + $0x34] sm:$0xf]
    %v584 = vld [vmem:[%s3 + $0x38] sm:$0xf]
    %v585 = vld [vmem:[%s3 + $0x3c] sm:$0xf]
    %v586 = vld [vmem:[%s4] sm:$0x1]
    %v588 = vperm.slane %v586, 0
    %v606 = vunpack.c.l.b16 %v570
    %v607 = vunpack.c.l.b16 %v571
    %v608 = vunpack.c.l.b16 %v572
    %v609 = vunpack.c.l.b16 %v573
    %v610 = vunpack.c.l.b16 %v574
    %v611 = vunpack.c.l.b16 %v575
    %v612 = vunpack.c.l.b16 %v576
    %v613 = vunpack.c.l.b16 %v577
    %v614 = vunpack.c.l.b16 %v578
    %v615 = vunpack.c.l.b16 %v579
    %v616 = vunpack.c.l.b16 %v580
    %v617 = vunpack.c.l.b16 %v581
    %v618 = vunpack.c.l.b16 %v582
    %v619 = vunpack.c.l.b16 %v583
    %v620 = vunpack.c.l.b16 %v584
    %v621 = vunpack.c.l.b16 %v585
    %v622 = vpack.c.b16 %v607, %v606
    %v623 = vpack.c.b16 %v609, %v608
    %v624 = vpack.c.b16 %v611, %v610
    %v625 = vpack.c.b16 %v613, %v612
    %v626 = vpack.c.b16 %v615, %v614
    %v627 = vpack.c.b16 %v617, %v616
    %v628 = vpack.c.b16 %v619, %v618
    %v629 = vpack.c.b16 %v621, %v620
    %638 = vmatpush.bf16.msra.mxu0 %v629
    %639 = vmatpush.bf16.msra.mxu0 %v628
    %640 = vmatpush.bf16.msra.mxu0 %v627
    %641 = vmatpush.bf16.msra.mxu0 %v626
    %642 = vmatpush.bf16.msra.mxu0 %v625
    %643 = vmatpush.bf16.msra.mxu0 %v624
    %644 = vmatpush.bf16.msra.mxu0 %v623
    %645 = vmatpush.bf16.msra.mxu0 %v622
    %646 = vmatmul.bf16.gmra.mxu0 %v118
    %v647 = vpop.f32.mrf.mxu0
    %v648 = vadd.f32 %v588, %v647
    %v649 = vpop.f32.mrf.mxu0
    %v650 = vadd.f32 %v588, %v649
    %651 = vmatmul.bf16.gmra.mxu0 %v119
    %v652 = vpop.f32.mrf.mxu0
    %v653 = vadd.f32 %v588, %v652
    %v654 = vpop.f32.mrf.mxu0
    %v655 = vadd.f32 %v588, %v654
    %656 = vmatmul.bf16.gmra.mxu0 %v120
    %v657 = vpop.f32.mrf.mxu0
    %v658 = vadd.f32 %v588, %v657
    %v659 = vpop.f32.mrf.mxu0
    %v660 = vadd.f32 %v588, %v659
    %661 = vmatmul.bf16.gmra.mxu0 %v121
    %v662 = vpop.f32.mrf.mxu0
    %v663 = vadd.f32 %v588, %v662
    %v664 = vpop.f32.mrf.mxu0
    %v665 = vadd.f32 %v588, %v664
    %666 = vmatmul.bf16.gmra.mxu0 %v122
    %v667 = vpop.f32.mrf.mxu0
    %v668 = vadd.f32 %v588, %v667
    %v669 = vpop.f32.mrf.mxu0
    %v670 = vadd.f32 %v588, %v669
    %671 = vmatmul.bf16.gmra.mxu0 %v123
    %v672 = vpop.f32.mrf.mxu0
    %v673 = vadd.f32 %v588, %v672
    %v674 = vpop.f32.mrf.mxu0
    %v675 = vadd.f32 %v588, %v674
    %676 = vmatmul.bf16.gmra.mxu0 %v124
    %v677 = vpop.f32.mrf.mxu0
    %v678 = vadd.f32 %v588, %v677
    %v679 = vpop.f32.mrf.mxu0
    %v680 = vadd.f32 %v588, %v679
    %681 = vmatmul.bf16.gmra.mxu0 %v125
    %v682 = vpop.f32.mrf.mxu0
    %v683 = vadd.f32 %v588, %v682
    %v684 = vpop.f32.mrf.mxu0
    %v685 = vadd.f32 %v588, %v684
    %686 = vdwg.mxu0
    %v687 = vmax.f32 %v648, 0.0
    %v688 = vmax.f32 %v650, 0.0
    %v689 = vmax.f32 %v653, 0.0
    %v690 = vmax.f32 %v655, 0.0
    %v691 = vmax.f32 %v658, 0.0
    %v692 = vmax.f32 %v660, 0.0
    %v693 = vmax.f32 %v663, 0.0
    %v694 = vmax.f32 %v665, 0.0
    %v695 = vmax.f32 %v668, 0.0
    %v696 = vmax.f32 %v670, 0.0
    %v697 = vmax.f32 %v673, 0.0
    %v698 = vmax.f32 %v675, 0.0
    %v699 = vmax.f32 %v678, 0.0
    %v700 = vmax.f32 %v680, 0.0
    %v701 = vmax.f32 %v683, 0.0
    %v702 = vmax.f32 %v685, 0.0
    %v703 = vadd.f32 %v687, %v688
    %v704 = vadd.f32 %v703, %v689
    %v705 = vadd.f32 %v704, %v690
    %v706 = vadd.f32 %v705, %v691
    %v707 = vadd.f32 %v706, %v692
    %v708 = vadd.f32 %v707, %v693
    %v709 = vadd.f32 %v708, %v694
    %v710 = vrot.slane %v709, 4
    %v711 = vadd.f32 %v709, %v710
    %v712 = vrot.slane %v711, 2
    %v713 = vadd.f32 %v711, %v712
    %v714 = vrot.slane %v713, 1
    %v715 = vadd.f32 %v713, %v714
    %v716 = vadd.f32 %v695, %v696
    %v717 = vadd.f32 %v716, %v697
    %v718 = vadd.f32 %v717, %v698
    %v719 = vadd.f32 %v718, %v699
    %v720 = vadd.f32 %v719, %v700
    %v721 = vadd.f32 %v720, %v701
    %v722 = vadd.f32 %v721, %v702
    %v723 = vrot.slane %v722, 4
    %v724 = vadd.f32 %v722, %v723
    %v725 = vrot.slane %v724, 2
    %v726 = vadd.f32 %v724, %v725
    %v727 = vrot.slane %v726, 1
    %v728 = vadd.f32 %v726, %v727
    %v729 = vmul.f32 %v715, %v567
    %v730 = vmul.f32 %v728, %v567
    %v731 = vmul.f32 %v729, %v568
    %v732 = vmul.f32 %v730, %v569
    %v733 = vpack.c.bf16 %v568, %v568
    %v734 = vpack.c.bf16 %v569, %v569
    %v735 = vld [vmem:[%s5] sm:$0xf]
    %v736 = vld [vmem:[%s5 + $0x4] sm:$0xf]
    %v737 = vld [vmem:[%s5 + $0x8] sm:$0xf]
    %v738 = vld [vmem:[%s5 + $0xc] sm:$0xf]
    %v739 = vld [vmem:[%s5 + $0x10] sm:$0xf]
    %v740 = vld [vmem:[%s5 + $0x14] sm:$0xf]
    %v741 = vld [vmem:[%s5 + $0x18] sm:$0xf]
    %v742 = vld [vmem:[%s5 + $0x1c] sm:$0xf]
    %v743 = vld [vmem:[%s5 + $0x20] sm:$0xf]
    %v744 = vld [vmem:[%s5 + $0x24] sm:$0xf]
    %v745 = vld [vmem:[%s5 + $0x28] sm:$0xf]
    %v746 = vld [vmem:[%s5 + $0x2c] sm:$0xf]
    %v747 = vld [vmem:[%s5 + $0x30] sm:$0xf]
    %v748 = vld [vmem:[%s5 + $0x34] sm:$0xf]
    %v749 = vld [vmem:[%s5 + $0x38] sm:$0xf]
    %v750 = vld [vmem:[%s5 + $0x3c] sm:$0xf]
    %v751 = vld [vmem:[%s6] sm:$0x1]
    %v753 = vperm.slane %v751, 0
    %v757 = vunpack.c.l.b16 %v733
    %v758 = vunpack.c.l.b16 %v734
    %vm759 = vcmask 1041409
    %v760 = vsel %vm759, %v758, %v757
    %v761 = vpack.c.b16 %v760, %v760
    %v779 = vunpack.c.l.b16 %v735
    %v780 = vunpack.c.l.b16 %v736
    %v781 = vunpack.c.l.b16 %v737
    %v782 = vunpack.c.l.b16 %v738
    %v783 = vunpack.c.l.b16 %v739
    %v784 = vunpack.c.l.b16 %v740
    %v785 = vunpack.c.l.b16 %v741
    %v786 = vunpack.c.l.b16 %v742
    %v787 = vunpack.c.l.b16 %v743
    %v788 = vunpack.c.l.b16 %v744
    %v789 = vunpack.c.l.b16 %v745
    %v790 = vunpack.c.l.b16 %v746
    %v791 = vunpack.c.l.b16 %v747
    %v792 = vunpack.c.l.b16 %v748
    %v793 = vunpack.c.l.b16 %v749
    %v794 = vunpack.c.l.b16 %v750
    %v795 = vpack.c.b16 %v780, %v779
    %v796 = vpack.c.b16 %v782, %v781
    %v797 = vpack.c.b16 %v784, %v783
    %v798 = vpack.c.b16 %v786, %v785
    %v799 = vpack.c.b16 %v788, %v787
    %v800 = vpack.c.b16 %v790, %v789
    %v801 = vpack.c.b16 %v792, %v791
    %v802 = vpack.c.b16 %v794, %v793
    %811 = vmatpush.bf16.msra.mxu0 %v802
    %812 = vmatpush.bf16.msra.mxu0 %v801
    %813 = vmatpush.bf16.msra.mxu0 %v800
    %814 = vmatpush.bf16.msra.mxu0 %v799
    %815 = vmatpush.bf16.msra.mxu0 %v798
    %816 = vmatpush.bf16.msra.mxu0 %v797
    %817 = vmatpush.bf16.msra.mxu0 %v796
    %818 = vmatpush.bf16.msra.mxu0 %v795
    %819 = vmatmul.bf16.gmra.mxu0 %v761
    %v820 = vpop.f32.mrf.mxu0
    %v821 = vadd.f32 %v753, %v820
    %v822 = vpop.f32.mrf.mxu0
    %823 = vdwg.mxu0
    %v824 = vpack.c.bf16 %v688, %v687
    %v825 = vpack.c.bf16 %v690, %v689
    %v826 = vpack.c.bf16 %v692, %v691
    %v827 = vpack.c.bf16 %v694, %v693
    %v828 = vpack.c.bf16 %v696, %v695
    %v829 = vpack.c.bf16 %v698, %v697
    %v830 = vpack.c.bf16 %v700, %v699
    %v831 = vpack.c.bf16 %v702, %v701
    %v832 = vld [vmem:[%s7] sm:$0xf]
    %v833 = vld [vmem:[%s7 + $0x4] sm:$0xf]
    %v834 = vld [vmem:[%s7 + $0x8] sm:$0xf]
    %v835 = vld [vmem:[%s7 + $0xc] sm:$0xf]
    %v836 = vld [vmem:[%s7 + $0x10] sm:$0xf]
    %v837 = vld [vmem:[%s7 + $0x14] sm:$0xf]
    %v838 = vld [vmem:[%s7 + $0x18] sm:$0xf]
    %v839 = vld [vmem:[%s7 + $0x1c] sm:$0xf]
    %v840 = vld [vmem:[%s7 + $0x20] sm:$0xf]
    %v841 = vld [vmem:[%s7 + $0x24] sm:$0xf]
    %v842 = vld [vmem:[%s7 + $0x28] sm:$0xf]
    %v843 = vld [vmem:[%s7 + $0x2c] sm:$0xf]
    %v844 = vld [vmem:[%s7 + $0x30] sm:$0xf]
    %v845 = vld [vmem:[%s7 + $0x34] sm:$0xf]
    %v846 = vld [vmem:[%s7 + $0x38] sm:$0xf]
    %v847 = vld [vmem:[%s7 + $0x3c] sm:$0xf]
    %v848 = vld [vmem:[%s8] sm:$0x1]
    %v850 = vperm.slane %v848, 0
    %v868 = vunpack.c.l.b16 %v832
    %v869 = vunpack.c.l.b16 %v833
    %v870 = vunpack.c.l.b16 %v834
    %v871 = vunpack.c.l.b16 %v835
    %v872 = vunpack.c.l.b16 %v836
    %v873 = vunpack.c.l.b16 %v837
    %v874 = vunpack.c.l.b16 %v838
    %v875 = vunpack.c.l.b16 %v839
    %v876 = vunpack.c.l.b16 %v840
    %v877 = vunpack.c.l.b16 %v841
    %v878 = vunpack.c.l.b16 %v842
    %v879 = vunpack.c.l.b16 %v843
    %v880 = vunpack.c.l.b16 %v844
    %v881 = vunpack.c.l.b16 %v845
    %v882 = vunpack.c.l.b16 %v846
    %v883 = vunpack.c.l.b16 %v847
    %v884 = vpack.c.b16 %v869, %v868
    %v885 = vpack.c.b16 %v871, %v870
    %v886 = vpack.c.b16 %v873, %v872
    %v887 = vpack.c.b16 %v875, %v874
    %v888 = vpack.c.b16 %v877, %v876
    %v889 = vpack.c.b16 %v879, %v878
    %v890 = vpack.c.b16 %v881, %v880
    %v891 = vpack.c.b16 %v883, %v882
    %900 = vmatpush.bf16.msra.mxu0 %v891
    %901 = vmatpush.bf16.msra.mxu0 %v890
    %902 = vmatpush.bf16.msra.mxu0 %v889
    %903 = vmatpush.bf16.msra.mxu0 %v888
    %904 = vmatpush.bf16.msra.mxu0 %v887
    %905 = vmatpush.bf16.msra.mxu0 %v886
    %906 = vmatpush.bf16.msra.mxu0 %v885
    %907 = vmatpush.bf16.msra.mxu0 %v884
    %908 = vmatmul.bf16.gmra.mxu0 %v824
    %v909 = vpop.f32.mrf.mxu0
    %v910 = vadd.f32 %v850, %v909
    %v911 = vpop.f32.mrf.mxu0
    %v912 = vadd.f32 %v850, %v911
    %913 = vmatmul.bf16.gmra.mxu0 %v825
    %v914 = vpop.f32.mrf.mxu0
    %v915 = vadd.f32 %v850, %v914
    %v916 = vpop.f32.mrf.mxu0
    %v917 = vadd.f32 %v850, %v916
    %918 = vmatmul.bf16.gmra.mxu0 %v826
    %v919 = vpop.f32.mrf.mxu0
    %v920 = vadd.f32 %v850, %v919
    %v921 = vpop.f32.mrf.mxu0
    %v922 = vadd.f32 %v850, %v921
    %923 = vmatmul.bf16.gmra.mxu0 %v827
    %v924 = vpop.f32.mrf.mxu0
    %v925 = vadd.f32 %v850, %v924
    %v926 = vpop.f32.mrf.mxu0
    %v927 = vadd.f32 %v850, %v926
    %928 = vmatmul.bf16.gmra.mxu0 %v828
    %v929 = vpop.f32.mrf.mxu0
    %v930 = vadd.f32 %v850, %v929
    %v931 = vpop.f32.mrf.mxu0
    %v932 = vadd.f32 %v850, %v931
    %933 = vmatmul.bf16.gmra.mxu0 %v829
    %v934 = vpop.f32.mrf.mxu0
    %v935 = vadd.f32 %v850, %v934
    %v936 = vpop.f32.mrf.mxu0
    %v937 = vadd.f32 %v850, %v936
    %938 = vmatmul.bf16.gmra.mxu0 %v830
    %v939 = vpop.f32.mrf.mxu0
    %v940 = vadd.f32 %v850, %v939
    %v941 = vpop.f32.mrf.mxu0
    %v942 = vadd.f32 %v850, %v941
    %943 = vmatmul.bf16.gmra.mxu0 %v831
    %v944 = vpop.f32.mrf.mxu0
    %v945 = vadd.f32 %v850, %v944
    %v946 = vpop.f32.mrf.mxu0
    %v947 = vadd.f32 %v850, %v946
    %948 = vdwg.mxu0
    %v950 = vrot.slane %v821, 1
    %v951 = vperm.slane %v821, 0
    %v952 = vperm.slane %v950, 0
    %v955 = vadd.f32 %v910, %v951
    %v956 = vadd.f32 %v912, %v951
    %v957 = vadd.f32 %v915, %v951
    %v958 = vadd.f32 %v917, %v951
    %v959 = vadd.f32 %v920, %v951
    %v960 = vadd.f32 %v922, %v951
    %v961 = vadd.f32 %v925, %v951
    %v962 = vadd.f32 %v927, %v951
    %v963 = vadd.f32 %v930, %v952
    %v964 = vadd.f32 %v932, %v952
    %v965 = vadd.f32 %v935, %v952
    %v966 = vadd.f32 %v937, %v952
    %v967 = vadd.f32 %v940, %v952
    %v968 = vadd.f32 %v942, %v952
    %v969 = vadd.f32 %v945, %v952
    %v970 = vadd.f32 %v947, %v952
    %v971 = vtanh.pop %v955
    %v972 = vtanh.pop %v956
    %v973 = vtanh.pop %v957
    %v974 = vtanh.pop %v958
    %v975 = vtanh.pop %v959
    %v976 = vtanh.pop %v960
    %v977 = vtanh.pop %v961
    %v978 = vtanh.pop %v962
    %v979 = vtanh.pop %v963
    %v980 = vtanh.pop %v964
    %v981 = vtanh.pop %v965
    %v982 = vtanh.pop %v966
    %v983 = vtanh.pop %v967
    %v984 = vtanh.pop %v968
    %v985 = vtanh.pop %v969
    %v986 = vtanh.pop %v970
    %v987 = vld [vmem:[%s9] sm:$0x1]
    %v989 = vperm.slane %v987, 0
    %v991 = vmul.f32 %v971, %v989
    %v992 = vmul.f32 %v972, %v989
    %v993 = vmul.f32 %v973, %v989
    %v994 = vmul.f32 %v974, %v989
    %v995 = vmul.f32 %v975, %v989
    %v996 = vmul.f32 %v976, %v989
    %v997 = vmul.f32 %v977, %v989
    %v998 = vmul.f32 %v978, %v989
    %v999 = vmul.f32 %v979, %v989
    %v1000 = vmul.f32 %v980, %v989
    %v1001 = vmul.f32 %v981, %v989
    %v1002 = vmul.f32 %v982, %v989
    %v1003 = vmul.f32 %v983, %v989
    %v1004 = vmul.f32 %v984, %v989
    %v1005 = vmul.f32 %v985, %v989
    %v1006 = vmul.f32 %v986, %v989
    %1007 = vadd.xlane.f32.xlu0 %v991
    %v1008 = vpop.xlane.xlu0 %1007
    %1009 = vadd.xlane.f32.xlu0 %v992
    %v1010 = vpop.xlane.xlu0 %1009
    %1011 = vadd.xlane.f32.xlu0 %v993
    %v1012 = vpop.xlane.xlu0 %1011
    %1013 = vadd.xlane.f32.xlu0 %v994
    %v1014 = vpop.xlane.xlu0 %1013
    %1015 = vadd.xlane.f32.xlu0 %v995
    %v1016 = vpop.xlane.xlu0 %1015
    %1017 = vadd.xlane.f32.xlu0 %v996
    %v1018 = vpop.xlane.xlu0 %1017
    %1019 = vadd.xlane.f32.xlu0 %v997
    %v1020 = vpop.xlane.xlu0 %1019
    %1021 = vadd.xlane.f32.xlu0 %v998
    %v1022 = vpop.xlane.xlu0 %1021
    %1023 = vadd.xlane.f32.xlu0 %v999
    %v1024 = vpop.xlane.xlu0 %1023
    %1025 = vadd.xlane.f32.xlu0 %v1000
    %v1026 = vpop.xlane.xlu0 %1025
    %1027 = vadd.xlane.f32.xlu0 %v1001
    %v1028 = vpop.xlane.xlu0 %1027
    %1029 = vadd.xlane.f32.xlu0 %v1002
    %v1030 = vpop.xlane.xlu0 %1029
    %1031 = vadd.xlane.f32.xlu0 %v1003
    %v1032 = vpop.xlane.xlu0 %1031
    %1033 = vadd.xlane.f32.xlu0 %v1004
    %v1034 = vpop.xlane.xlu0 %1033
    %1035 = vadd.xlane.f32.xlu0 %v1005
    %v1036 = vpop.xlane.xlu0 %1035
    %1037 = vadd.xlane.f32.xlu0 %v1006
    %v1038 = vpop.xlane.xlu0 %1037
    %v1039 = vld [vmem:[#allocation2] sm:$0x1]
    %v1041 = vperm.slane %v1039, 0
    %v1043 = vadd.f32 %v1008, %v1041
    %v1044 = vadd.f32 %v1010, %v1041
    %v1045 = vadd.f32 %v1012, %v1041
    %v1046 = vadd.f32 %v1014, %v1041
    %v1047 = vadd.f32 %v1016, %v1041
    %v1048 = vadd.f32 %v1018, %v1041
    %v1049 = vadd.f32 %v1020, %v1041
    %v1050 = vadd.f32 %v1022, %v1041
    %v1051 = vadd.f32 %v1024, %v1041
    %v1052 = vadd.f32 %v1026, %v1041
    %v1053 = vadd.f32 %v1028, %v1041
    %v1054 = vadd.f32 %v1030, %v1041
    %v1055 = vadd.f32 %v1032, %v1041
    %v1056 = vadd.f32 %v1034, %v1041
    %v1057 = vadd.f32 %v1036, %v1041
    %v1058 = vadd.f32 %v1038, %v1041
    %vm1059 = vcmask 7168
    %v1060 = vsel %vm1059, %v1043, -inf
    %v1061 = vsel %vm1059, %v1044, -inf
    %v1062 = vsel %vm1059, %v1045, -inf
    %v1063 = vmax.f32 %v1060, %v1062
    %v1064 = vsel %vm1059, %v1046, -inf
    %v1065 = vmax.f32 %v1061, %v1064
    %v1066 = vsel %vm1059, %v1047, -inf
    %v1067 = vmax.f32 %v1063, %v1066
    %v1068 = vsel %vm1059, %v1048, -inf
    %v1069 = vmax.f32 %v1065, %v1068
    %v1070 = vsel %vm1059, %v1049, -inf
    %v1071 = vmax.f32 %v1067, %v1070
    %v1072 = vsel %vm1059, %v1050, -inf
    %v1073 = vmax.f32 %v1069, %v1072
    %v1074 = vmax.f32 %v1071, %v1073
    %v1075 = vrot.slane %v1074, 4
    %v1076 = vmax.f32 %v1074, %v1075
    %v1077 = vrot.slane %v1076, 2
    %v1078 = vmax.f32 %v1076, %v1077
    %v1079 = vrot.slane %v1078, 1
    %v1080 = vmax.f32 %v1078, %v1079
    %v1081 = vsel %vm1059, %v1051, -inf
    %v1082 = vsel %vm1059, %v1052, -inf
    %v1083 = vsel %vm1059, %v1053, -inf
    %v1084 = vmax.f32 %v1081, %v1083
    %v1085 = vsel %vm1059, %v1054, -inf
    %v1086 = vmax.f32 %v1082, %v1085
    %v1087 = vsel %vm1059, %v1055, -inf
    %v1088 = vmax.f32 %v1084, %v1087
    %v1089 = vsel %vm1059, %v1056, -inf
    %v1090 = vmax.f32 %v1086, %v1089
    %v1091 = vsel %vm1059, %v1057, -inf
    %v1092 = vmax.f32 %v1088, %v1091
    %v1093 = vsel %vm1059, %v1058, -inf
    %v1094 = vmax.f32 %v1090, %v1093
    %v1095 = vmax.f32 %v1092, %v1094
    %v1096 = vrot.slane %v1095, 4
    %v1097 = vmax.f32 %v1095, %v1096
    %v1098 = vrot.slane %v1097, 2
    %v1099 = vmax.f32 %v1097, %v1098
    %v1100 = vrot.slane %v1099, 1
    %v1101 = vmax.f32 %v1099, %v1100
    %v1102 = vsub.f32 %v1043, %v1080
    %v1103 = vsub.f32 %v1044, %v1080
    %v1104 = vsub.f32 %v1045, %v1080
    %v1105 = vsub.f32 %v1046, %v1080
    %v1106 = vsub.f32 %v1047, %v1080
    %v1107 = vsub.f32 %v1048, %v1080
    %v1108 = vsub.f32 %v1049, %v1080
    %v1109 = vsub.f32 %v1050, %v1080
    %v1110 = vsub.f32 %v1051, %v1101
    %v1111 = vsub.f32 %v1052, %v1101
    %v1112 = vsub.f32 %v1053, %v1101
    %v1113 = vsub.f32 %v1054, %v1101
    %v1114 = vsub.f32 %v1055, %v1101
    %v1115 = vsub.f32 %v1056, %v1101
    %v1116 = vsub.f32 %v1057, %v1101
    %v1117 = vsub.f32 %v1058, %v1101
    %v1118 = vmul.f32 %v1102, 1.442695
    %v1119 = vpow.pop %v1118
    %v1120 = vmul.f32 %v1103, 1.442695
    %v1121 = vpow.pop %v1120
    %v1122 = vmul.f32 %v1104, 1.442695
    %v1123 = vpow.pop %v1122
    %v1124 = vmul.f32 %v1105, 1.442695
    %v1125 = vpow.pop %v1124
    %v1126 = vmul.f32 %v1106, 1.442695
    %v1127 = vpow.pop %v1126
    %v1128 = vmul.f32 %v1107, 1.442695
    %v1129 = vpow.pop %v1128
    %v1130 = vmul.f32 %v1108, 1.442695
    %v1131 = vpow.pop %v1130
    %v1132 = vmul.f32 %v1109, 1.442695
    %v1133 = vpow.pop %v1132
    %v1134 = vmul.f32 %v1110, 1.442695
    %v1135 = vpow.pop %v1134
    %v1136 = vmul.f32 %v1111, 1.442695
    %v1137 = vpow.pop %v1136
    %v1138 = vmul.f32 %v1112, 1.442695
    %v1139 = vpow.pop %v1138
    %v1140 = vmul.f32 %v1113, 1.442695
    %v1141 = vpow.pop %v1140
    %v1142 = vmul.f32 %v1114, 1.442695
    %v1143 = vpow.pop %v1142
    %v1144 = vmul.f32 %v1115, 1.442695
    %v1145 = vpow.pop %v1144
    %v1146 = vmul.f32 %v1116, 1.442695
    %v1147 = vpow.pop %v1146
    %v1148 = vmul.f32 %v1117, 1.442695
    %v1149 = vpow.pop %v1148
    %v1150 = vsel %vm1059, %v1119, 0.0
    %v1151 = vsel %vm1059, %v1121, 0.0
    %v1152 = vadd.f32 %v1150, %v1151
    %v1153 = vsel %vm1059, %v1123, 0.0
    %v1154 = vadd.f32 %v1152, %v1153
    %v1155 = vsel %vm1059, %v1125, 0.0
    %v1156 = vadd.f32 %v1154, %v1155
    %v1157 = vsel %vm1059, %v1127, 0.0
    %v1158 = vadd.f32 %v1156, %v1157
    %v1159 = vsel %vm1059, %v1129, 0.0
    %v1160 = vadd.f32 %v1158, %v1159
    %v1161 = vsel %vm1059, %v1131, 0.0
    %v1162 = vadd.f32 %v1160, %v1161
    %v1163 = vsel %vm1059, %v1133, 0.0
    %v1164 = vadd.f32 %v1162, %v1163
    %v1165 = vrot.slane %v1164, 4
    %v1166 = vadd.f32 %v1164, %v1165
    %v1167 = vrot.slane %v1166, 2
    %v1168 = vadd.f32 %v1166, %v1167
    %v1169 = vrot.slane %v1168, 1
    %v1170 = vadd.f32 %v1168, %v1169
    %v1171 = vsel %vm1059, %v1135, 0.0
    %v1172 = vsel %vm1059, %v1137, 0.0
    %v1173 = vadd.f32 %v1171, %v1172
    %v1174 = vsel %vm1059, %v1139, 0.0
    %v1175 = vadd.f32 %v1173, %v1174
    %v1176 = vsel %vm1059, %v1141, 0.0
    %v1177 = vadd.f32 %v1175, %v1176
    %v1178 = vsel %vm1059, %v1143, 0.0
    %v1179 = vadd.f32 %v1177, %v1178
    %v1180 = vsel %vm1059, %v1145, 0.0
    %v1181 = vadd.f32 %v1179, %v1180
    %v1182 = vsel %vm1059, %v1147, 0.0
    %v1183 = vadd.f32 %v1181, %v1182
    %v1184 = vsel %vm1059, %v1149, 0.0
    %v1185 = vadd.f32 %v1183, %v1184
    %v1186 = vrot.slane %v1185, 4
    %v1187 = vadd.f32 %v1185, %v1186
    %v1188 = vrot.slane %v1187, 2
    %v1189 = vadd.f32 %v1187, %v1188
    %v1190 = vrot.slane %v1189, 1
    %v1191 = vadd.f32 %v1189, %v1190
    %v1192 = vrcp.pop %v1170
    %v1193 = vrcp.pop %v1191
    %v1194 = vmul.f32 %v1119, %v1192
    %v1195 = vmul.f32 %v1121, %v1192
    %v1196 = vmul.f32 %v1123, %v1192
    %v1197 = vmul.f32 %v1125, %v1192
    %v1198 = vmul.f32 %v1127, %v1192
    %v1199 = vmul.f32 %v1129, %v1192
    %v1200 = vmul.f32 %v1131, %v1192
    %v1201 = vmul.f32 %v1133, %v1192
    %v1202 = vmul.f32 %v1135, %v1193
    %v1203 = vmul.f32 %v1137, %v1193
    %v1204 = vmul.f32 %v1139, %v1193
    %v1205 = vmul.f32 %v1141, %v1193
    %v1206 = vmul.f32 %v1143, %v1193
    %v1207 = vmul.f32 %v1145, %v1193
    %v1208 = vmul.f32 %v1147, %v1193
    %v1209 = vmul.f32 %v1149, %v1193
    %1211 = vset.pattern.permute.xlu0 0
    %1212 = vperm.xlu0 %1211, %v1194
    %v1213 = vpop.permute.xlu0 %1212
    %1216 = vset.pattern.permute.xlu0 0
    %1217 = vperm.xlu0 %1216, %v1195
    %v1218 = vpop.permute.xlu0 %1217
    %1221 = vset.pattern.permute.xlu0 0
    %1222 = vperm.xlu0 %1221, %v1196
    %v1223 = vpop.permute.xlu0 %1222
    %1226 = vset.pattern.permute.xlu0 0
    %1227 = vperm.xlu0 %1226, %v1197
    %v1228 = vpop.permute.xlu0 %1227
    %1231 = vset.pattern.permute.xlu0 0
    %1232 = vperm.xlu0 %1231, %v1198
    %v1233 = vpop.permute.xlu0 %1232
    %1236 = vset.pattern.permute.xlu0 0
    %1237 = vperm.xlu0 %1236, %v1199
    %v1238 = vpop.permute.xlu0 %1237
    %1241 = vset.pattern.permute.xlu0 0
    %1242 = vperm.xlu0 %1241, %v1200
    %v1243 = vpop.permute.xlu0 %1242
    %1246 = vset.pattern.permute.xlu0 0
    %1247 = vperm.xlu0 %1246, %v1201
    %v1248 = vpop.permute.xlu0 %1247
    %1251 = vset.pattern.permute.xlu0 0
    %1252 = vperm.xlu0 %1251, %v1202
    %v1253 = vpop.permute.xlu0 %1252
    %1256 = vset.pattern.permute.xlu0 0
    %1257 = vperm.xlu0 %1256, %v1203
    %v1258 = vpop.permute.xlu0 %1257
    %1261 = vset.pattern.permute.xlu0 0
    %1262 = vperm.xlu0 %1261, %v1204
    %v1263 = vpop.permute.xlu0 %1262
    %1266 = vset.pattern.permute.xlu0 0
    %1267 = vperm.xlu0 %1266, %v1205
    %v1268 = vpop.permute.xlu0 %1267
    %1271 = vset.pattern.permute.xlu0 0
    %1272 = vperm.xlu0 %1271, %v1206
    %v1273 = vpop.permute.xlu0 %1272
    %1276 = vset.pattern.permute.xlu0 0
    %1277 = vperm.xlu0 %1276, %v1207
    %v1278 = vpop.permute.xlu0 %1277
    %1281 = vset.pattern.permute.xlu0 0
    %1282 = vperm.xlu0 %1281, %v1208
    %v1283 = vpop.permute.xlu0 %1282
    %1286 = vset.pattern.permute.xlu0 0
    %1287 = vperm.xlu0 %1286, %v1209
    %v1288 = vpop.permute.xlu0 %1287
    %v1290 = vmul.f32 %v687, %v1213
    %v1291 = vmul.f32 %v688, %v1218
    %v1292 = vmul.f32 %v689, %v1223
    %v1293 = vmul.f32 %v690, %v1228
    %v1294 = vmul.f32 %v691, %v1233
    %v1295 = vmul.f32 %v692, %v1238
    %v1296 = vmul.f32 %v693, %v1243
    %v1297 = vmul.f32 %v694, %v1248
    %v1298 = vmul.f32 %v695, %v1253
    %v1299 = vmul.f32 %v696, %v1258
    %v1300 = vmul.f32 %v697, %v1263
    %v1301 = vmul.f32 %v698, %v1268
    %v1302 = vmul.f32 %v699, %v1273
    %v1303 = vmul.f32 %v700, %v1278
    %v1304 = vmul.f32 %v701, %v1283
    %v1305 = vmul.f32 %v702, %v1288
    %v1306 = vadd.f32 %v1290, %v1291
    %v1307 = vadd.f32 %v1306, %v1292
    %v1308 = vadd.f32 %v1307, %v1293
    %v1309 = vadd.f32 %v1308, %v1294
    %v1310 = vadd.f32 %v1309, %v1295
    %v1311 = vadd.f32 %v1310, %v1296
    %v1312 = vadd.f32 %v1311, %v1297
    %v1313 = vrot.slane %v1312, 4
    %v1314 = vadd.f32 %v1312, %v1313
    %v1315 = vrot.slane %v1314, 2
    %v1316 = vadd.f32 %v1314, %v1315
    %v1317 = vrot.slane %v1316, 1
    %v1318 = vadd.f32 %v1316, %v1317
    %v1319 = vadd.f32 %v1298, %v1299
    %v1320 = vadd.f32 %v1319, %v1300
    %v1321 = vadd.f32 %v1320, %v1301
    %v1322 = vadd.f32 %v1321, %v1302
    %v1323 = vadd.f32 %v1322, %v1303
    %v1324 = vadd.f32 %v1323, %v1304
    %v1325 = vadd.f32 %v1324, %v1305
    %v1326 = vrot.slane %v1325, 4
    %v1327 = vadd.f32 %v1325, %v1326
    %v1328 = vrot.slane %v1327, 2
    %v1329 = vadd.f32 %v1327, %v1328
    %v1330 = vrot.slane %v1329, 1
    %v1331 = vadd.f32 %v1329, %v1330
    %v1332 = vmul.f32 %v1318, %v567
    %v1333 = vmul.f32 %v1331, %v567
    %v1334 = vld [vmem:[%s11] sm:$0xff]
    %v1335 = vld [vmem:[%s11 + $0x8] sm:$0xff]
    %v1336 = vld [vmem:[%s11 + $0x10] sm:$0xff]
    %v1337 = vld [vmem:[%s11 + $0x18] sm:$0xff]
    %v1338 = vld [vmem:[%s11 + $0x20] sm:$0xff]
    %v1339 = vld [vmem:[%s11 + $0x28] sm:$0xff]
    %v1340 = vld [vmem:[%s11 + $0x30] sm:$0xff]
    %v1341 = vld [vmem:[%s11 + $0x38] sm:$0xff]
    %v1342 = vld [vmem:[%s11 + $0x40] sm:$0xff]
    %v1343 = vld [vmem:[%s11 + $0x48] sm:$0xff]
    %v1344 = vld [vmem:[%s11 + $0x50] sm:$0xff]
    %v1345 = vld [vmem:[%s11 + $0x58] sm:$0xff]
    %v1346 = vld [vmem:[%s11 + $0x60] sm:$0xff]
    %v1347 = vld [vmem:[%s11 + $0x68] sm:$0xff]
    %v1348 = vld [vmem:[%s11 + $0x70] sm:$0xff]
    %v1349 = vld [vmem:[%s11 + $0x78] sm:$0xff]
    %v1350 = vld [vmem:[%s12] sm:$0xff]
    %v1351 = vld [vmem:[%s12 + $0x8] sm:$0xff]
    %v1352 = vld [vmem:[%s12 + $0x10] sm:$0xff]
    %v1353 = vld [vmem:[%s12 + $0x18] sm:$0xff]
    %v1354 = vld [vmem:[%s12 + $0x20] sm:$0xff]
    %v1355 = vld [vmem:[%s12 + $0x28] sm:$0xff]
    %v1356 = vld [vmem:[%s12 + $0x30] sm:$0xff]
    %v1357 = vld [vmem:[%s12 + $0x38] sm:$0xff]
    %v1358 = vld [vmem:[%s12 + $0x40] sm:$0xff]
    %v1359 = vld [vmem:[%s12 + $0x48] sm:$0xff]
    %v1360 = vld [vmem:[%s12 + $0x50] sm:$0xff]
    %v1361 = vld [vmem:[%s12 + $0x58] sm:$0xff]
    %v1362 = vld [vmem:[%s12 + $0x60] sm:$0xff]
    %v1363 = vld [vmem:[%s12 + $0x68] sm:$0xff]
    %v1364 = vld [vmem:[%s12 + $0x70] sm:$0xff]
    %v1365 = vld [vmem:[%s12 + $0x78] sm:$0xff]
    %v1368 = vsel %vm759, %v1333, %v1332
    %1370 = vmatpush.msra.mxu0 %v1365
    %1371 = vmatpush.msra.mxu0 %v1364
    %1372 = vmatpush.msra.mxu0 %v1363
    %1373 = vmatpush.msra.mxu0 %v1362
    %1374 = vmatpush.msra.mxu0 %v1361
    %1375 = vmatpush.msra.mxu0 %v1360
    %1376 = vmatpush.msra.mxu0 %v1359
    %1377 = vmatpush.msra.mxu0 %v1358
    %1378 = vmatpush.msra.mxu0 %v1357
    %1379 = vmatpush.msra.mxu0 %v1356
    %1380 = vmatpush.msra.mxu0 %v1355
    %1381 = vmatpush.msra.mxu0 %v1354
    %1382 = vmatpush.msra.mxu0 %v1353
    %1383 = vmatpush.msra.mxu0 %v1352
    %1384 = vmatpush.msra.mxu0 %v1351
    %1385 = vmatpush.msra.mxu0 %v1350
    %1386 = vmatmul.f32.gmra.mxu0 %v1368
    %v1387 = vpop.f32.mrf.mxu0
    %v1388 = vadd.f32 0.0, %v1387
    %1389 = vdwg.mxu0
    %v1392 = vsel %vm759, %v732, %v731
    %1394 = vmatpush.msra.mxu0 %v1349
    %1395 = vmatpush.msra.mxu0 %v1348
    %1396 = vmatpush.msra.mxu0 %v1347
    %1397 = vmatpush.msra.mxu0 %v1346
    %1398 = vmatpush.msra.mxu0 %v1345
    %1399 = vmatpush.msra.mxu0 %v1344
    %1400 = vmatpush.msra.mxu0 %v1343
    %1401 = vmatpush.msra.mxu0 %v1342
    %1402 = vmatpush.msra.mxu0 %v1341
    %1403 = vmatpush.msra.mxu0 %v1340
    %1404 = vmatpush.msra.mxu0 %v1339
    %1405 = vmatpush.msra.mxu0 %v1338
    %1406 = vmatpush.msra.mxu0 %v1337
    %1407 = vmatpush.msra.mxu0 %v1336
    %1408 = vmatpush.msra.mxu0 %v1335
    %1409 = vmatpush.msra.mxu0 %v1334
    %1410 = vmatmul.f32.gmra.mxu0 %v1392
    %v1411 = vpop.f32.mrf.mxu0
    %v1412 = vadd.f32 %v1388, %v1411
    %1413 = vdwg.mxu0
    %v1414 = vld [vmem:[%s13] sm:$0x1]
    %v1416 = vperm.slane %v1414, 0
    %v1418 = vadd.f32 %v1412, %v1416
    %vm1419 = vcmask 58368
    %1420 = vst.msk [vmem:[#allocation3] sm:$0x3] %vm1419, %v1418
    // Predicated region
    $region58: #{pdanet_forward.1} parent=1 // pred_check
      _
    $region59: #{pdanet_forward.1} parent=1 // pred_check_branch
      %1422 = sbr.rel (0) target = $region61
    $region60: #{pdanet_forward.1} parent=1 // pred_region
      %1424 = vsyncadd [#allocation4], 0
      %s1426 = sshll.u32 [#allocation3], 4
      %s1427 = int_to_ptr.vmem [resolvable:$true] %s1426
      %s1428 = sshll.u32 %s14, 4
      %s1429 = int_to_ptr.hbm [resolvable:$true] %s1428
      %1431 = dma.vmem_to_hbm [thread:$0]  %s1427, 32, %s1429, [#allocation4]
    $region61: #{pdanet_forward.1} parent=1 // pred_fallthru
      _
    // Predicated region
    $region62: #{pdanet_forward.1} parent=1 // pred_check
      _
    $region63: #{pdanet_forward.1} parent=1 // pred_check_branch
      %1433 = sbr.rel (0) target = $region65
    $region64: #{pdanet_forward.1} parent=1 // pred_region
      %1435 = dma.done [#allocation4], 32
    $region65: #{pdanet_forward.1} parent=1 // pred_fallthru
      _
    %1436 = vsyncpa [#allocation4], 1

</llo_original>
